<compile_context>
chip_gen: v6e
topology: v6e:2x2x1
jax: 0.10.0
libtpu: 0.0.40
codegen_flags: <defaults>
</compile_context>

<pallas_src>
import functools

import jax
import jax.numpy as jnp
import numpy as np
from jax.experimental import pallas as pl
from jax.experimental.pallas import tpu as pltpu

INPUT_CHANNELS = 64


# ---------------------------------------------------------------------------
# Pallas kernel: whole autoencoder forward for one batch tile.
# ---------------------------------------------------------------------------
def _autoencoder_kernel(x_ref,
                        w1, b1, w2, b2, w3, b3, w4, b4,   # im2col convs 1-4
                        w5e, w5o, b5,                     # fused upsample+conv5
                        w6, b6,                           # fused upsample+conv6
                        out_ref):
    f32 = jnp.float32

    def shift_prev(x):                      # y[:, t] = x[:, t-1], y[:, 0] = 0
        z = jnp.zeros_like(x[:, :1, :])
        return jnp.concatenate([z, x[:, :-1, :]], axis=1)

    def shift_next(x):                      # y[:, t] = x[:, t+1], y[:, L-1] = 0
        z = jnp.zeros_like(x[:, :1, :])
        return jnp.concatenate([x[:, 1:, :], z], axis=1)

    def matmul(p, w_ref):
        return jax.lax.dot_general(
            p, w_ref[...],
            dimension_numbers=(((2,), (0,)), ((), ())),
            preferred_element_type=f32)

    def conv3(x, w_ref, b_ref):
        # im2col: single MXU issue, contraction dim = 3*Cin.
        patches = jnp.concatenate([shift_prev(x), x, shift_next(x)], axis=-1)
        return matmul(patches, w_ref) + b_ref[...]

    def fused_up_conv3(g, we_ref, wo_ref, b_ref):
        # conv(k=3, pad=1) applied to nearest-x2-upsampled g, evaluated at the
        # low resolution:  y[2t] = g[t-1]@w0 + g[t]@(w1+w2) + b
        #                  y[2t+1] = g[t]@(w0+w1) + g[t+1]@w2 + b
        pe = jnp.concatenate([shift_prev(g), g], axis=-1)
        po = jnp.concatenate([g, shift_next(g)], axis=-1)
        ye = matmul(pe, we_ref) + b_ref[...]
        yo = matmul(po, wo_ref) + b_ref[...]
        return ye, yo

    def interleave(ye, yo):                 # rows 2t <- ye[t], 2t+1 <- yo[t]
        n, lg, c = ye.shape
        y = jnp.stack([ye, yo], axis=2)     # (n, lg, 2, c)
        return y.reshape(n, 2 * lg, c)

    def relu(v):
        return jnp.maximum(v, 0.0)

    def maxpool2(x):                        # MaxPool1d(2, 2) along L
        n, l, c = x.shape
        r = x.reshape(n, l // 2, 2, c)
        return jnp.maximum(r[:, :, 0, :], r[:, :, 1, :])

    x = x_ref[...].astype(f32)              # (TN, L, 64)

    # ---------------- encoder ----------------
    h = maxpool2(relu(conv3(x, w1, b1)))    # (TN, L/2, 32)
    h = maxpool2(relu(conv3(h, w2, b2)))    # (TN, L/4, 16)
    h = maxpool2(relu(conv3(h, w3, b3)))    # (TN, L/8,  8)

    # ---------------- decoder ----------------
    g = relu(conv3(h, w4, b4))              # (TN, L/8, 16)

    ye, yo = fused_up_conv3(g, w5e, w5o, b5)            # each (TN, L/8, 32)
    g = interleave(relu(ye), relu(yo))                  # (TN, L/4, 32)

    # final conv fused with its preceding upsample; single combined matmul.
    patches = jnp.concatenate([shift_prev(g), g, shift_next(g)], axis=-1)
    y = matmul(patches, w6) + b6[...]                   # (TN, L/4, 128)
    # cols 0:64 = output rows 2t, cols 64:128 = output rows 2t+1  (lane-dense)
    out_ref[...] = jax.nn.sigmoid(y).astype(out_ref.dtype)


# ---------------------------------------------------------------------------
# Trace-time weight preparation (PyTorch (Cout, Cin, 3) -> kernel layouts).
# ---------------------------------------------------------------------------
def _prep_params(params):
    (w1, b1), (w2, b2), (w3, b3), (w4, b4), (w5, b5), (w6, b6) = params

    def taps(w):                            # -> 3 x (Cin, Cout)
        t = jnp.transpose(w, (2, 1, 0)).astype(jnp.float32)
        return t[0], t[1], t[2]

    def im2col_w(w):                        # -> (3*Cin, Cout)
        t = jnp.transpose(w, (2, 1, 0)).astype(jnp.float32)
        return t.reshape(-1, t.shape[-1])

    def bias(b):
        return b.reshape(1, -1).astype(jnp.float32)

    W1, W2, W3, W4 = (im2col_w(w) for w in (w1, w2, w3, w4))

    # fused upsample + conv5 (two matmuls, even / odd output rows)
    k0, k1, k2 = taps(w5)
    W5e = jnp.concatenate([k0, k1 + k2], axis=0)          # (2*Cin, Cout)
    W5o = jnp.concatenate([k0 + k1, k2], axis=0)

    # fused upsample + conv6 (single combined matmul, even|odd column halves)
    q0, q1, q2 = taps(w6)
    z = jnp.zeros_like(q0)
    W6 = jnp.concatenate([
        jnp.concatenate([q0, z], axis=1),
        jnp.concatenate([q1 + q2, q0 + q1], axis=1),
        jnp.concatenate([z, q2], axis=1)], axis=0)        # (3*Cin, 2*Cout)
    B6 = jnp.concatenate([b6, b6]).reshape(1, -1).astype(jnp.float32)

    return [W1, bias(b1), W2, bias(b2), W3, bias(b3), W4, bias(b4),
            W5e, W5o, bias(b5), W6, B6]


# ---------------------------------------------------------------------------
# Wrapper: batch-tiled pallas_call + NCL plumbing.
# ---------------------------------------------------------------------------
def autoencoder_forward(x_ncl, params, *, tn=None,
                        vmem_limit_bytes=48 * 1024 * 1024):
    """x_ncl: (N, 64, L) f32; returns (N, 64, L//2) f32 (PyTorch semantics)."""
    N, C, L = x_ncl.shape
    assert C == INPUT_CHANNELS
    assert L % 8 == 0 and L >= 16, "need L % 8 == 0 (three maxpools) and L >= 16"

    x_nlc = jnp.transpose(x_ncl, (0, 2, 1))               # -> (N, L, 64)
    flat = _prep_params(params)

    if tn is None:
        # target ~2 MiB per (double-buffered) input block
        tn = max(1, min(N, (2 * 1024 * 1024) // (L * C * 4)))
    grid = (pl.cdiv(N, tn),)
    lq = L // 4

    weight_specs = [pl.BlockSpec(a.shape, lambda i: (0, 0)) for a in flat]

    flops = 2 * N * (L * 192 * 32 + (L // 2) * 96 * 16 + (L // 4) * 48 * 8 +
                     (L // 8) * 24 * 16 + 2 * (L // 8) * 32 * 32 +
                     (L // 4) * 96 * 128)
    bytes_accessed = 4 * (N * L * C + N * lq * 2 * C +
                          sum(int(a.size) for a in flat))

    out_pre = pl.pallas_call(
        _autoencoder_kernel,
        out_shape=jax.ShapeDtypeStruct((N, lq, 2 * C), jnp.float32),
        grid=grid,
        in_specs=[pl.BlockSpec((tn, L, C), lambda i: (i, 0, 0))] + weight_specs,
        out_specs=pl.BlockSpec((tn, lq, 2 * C), lambda i: (i, 0, 0)),
        compiler_params=pltpu.CompilerParams(
            dimension_semantics=("parallel",),
            vmem_limit_bytes=vmem_limit_bytes),
        cost_estimate=pl.CostEstimate(
            flops=flops, transcendentals=N * (L // 2) * C,
            bytes_accessed=bytes_accessed),
    )(x_nlc, *flat)

    # un-interleave even/odd rows (free reshape) and go back to NCL.
    out_nlc = out_pre.reshape(N, lq, 2, C).reshape(N, L // 2, C)
    return jnp.transpose(out_nlc, (0, 2, 1))              # -> (N, 64, L//2)


# ---------------------------------------------------------------------------
# Deterministic parameter init (PyTorch-shaped: (Cout, Cin, 3) + (Cout,)).
# ---------------------------------------------------------------------------
def init_params(key):
    layer_dims = [  # (Cin, Cout) in forward order
        (INPUT_CHANNELS, 32), (32, 16), (16, 8),       # encoder
        (8, 16), (16, 32), (32, INPUT_CHANNELS),       # decoder
    ]
    params = []
    for (cin, cout) in layer_dims:
        key, kw, kb = jax.random.split(key, 3)
        bound = 1.0 / np.sqrt(cin * 3)
        w = jax.random.uniform(kw, (cout, cin, 3), jnp.float32, -bound, bound)
        b = jax.random.uniform(kb, (cout,), jnp.float32, -bound, bound)
        params.append((w, b))
    return params


# ---------------------------------------------------------------------------
# Pure-JAX reference (same math, no Pallas) for a sanity check.
# ---------------------------------------------------------------------------
def reference_forward(x_ncl, params):
    def conv(x, w, b):  # x: (N, Cin, L), w: (Cout, Cin, 3)
        return jax.lax.conv_general_dilated(
            x, w, window_strides=(1,), padding=((1, 1),),
            dimension_numbers=("NCH", "OIH", "NCH")) + b[None, :, None]

    def maxpool(x):
        N, C, L = x.shape
        return jnp.max(x.reshape(N, C, L // 2, 2), axis=-1)

    def up(x):
        return jnp.repeat(x, 2, axis=-1)

    (w1, b1), (w2, b2), (w3, b3), (w4, b4), (w5, b5), (w6, b6) = params
    h = maxpool(jax.nn.relu(conv(x_ncl, w1, b1)))
    h = maxpool(jax.nn.relu(conv(h, w2, b2)))
    h = maxpool(jax.nn.relu(conv(h, w3, b3)))
    h = up(jax.nn.relu(conv(h, w4, b4)))
    h = up(jax.nn.relu(conv(h, w5, b5)))
    return jax.nn.sigmoid(conv(h, w6, b6))


if __name__ == "__main__":
    key = jax.random.PRNGKey(0)
    key, kx = jax.random.split(key)

    N, L = 4, 32                                  # input: (4, 64, 32) NCL
    x = jax.random.normal(kx, (N, INPUT_CHANNELS, L), jnp.float32)
    params = init_params(key)

    fwd = jax.jit(functools.partial(autoencoder_forward, tn=2))
    out = jax.block_until_ready(fwd(x, params))

    ref = jax.block_until_ready(reference_forward(x, params))
    assert out.shape == (N, INPUT_CHANNELS, L // 2), out.shape
    np.testing.assert_allclose(np.asarray(out), np.asarray(ref),
                               atol=1e-4, rtol=1e-4)

    print("KERNEL_OK")
</pallas_src>

<mosaic_0001>
module attributes {stable_mosaic.version = 11 : i64} {
  func.func @_autoencoder_kernel(%arg0: i32, %arg1: memref<2x32x64xf32, #tpu.memory_space<vmem>>, %arg2: memref<192x32xf32, #tpu.memory_space<vmem>>, %arg3: memref<1x32xf32, #tpu.memory_space<vmem>>, %arg4: memref<96x16xf32, #tpu.memory_space<vmem>>, %arg5: memref<1x16xf32, #tpu.memory_space<vmem>>, %arg6: memref<48x8xf32, #tpu.memory_space<vmem>>, %arg7: memref<1x8xf32, #tpu.memory_space<vmem>>, %arg8: memref<24x16xf32, #tpu.memory_space<vmem>>, %arg9: memref<1x16xf32, #tpu.memory_space<vmem>>, %arg10: memref<32x32xf32, #tpu.memory_space<vmem>>, %arg11: memref<32x32xf32, #tpu.memory_space<vmem>>, %arg12: memref<1x32xf32, #tpu.memory_space<vmem>>, %arg13: memref<96x128xf32, #tpu.memory_space<vmem>>, %arg14: memref<1x128xf32, #tpu.memory_space<vmem>>, %arg15: memref<2x8x128xf32, #tpu.memory_space<vmem>>) attributes {dimension_semantics = [#tpu.dimension_semantics<parallel>], iteration_bounds = array<i64: 2>, scalar_prefetch = 0 : i64, scratch_operands = 0 : i64, tpu.core_type = #tpu.core_type<tc>, window_params = [{transform_indices = @transform_0, window_bounds = array<i64: 2, 32, 64>}, {pipeline_mode = #tpu.pipeline_mode<synchronous>, transform_indices = @transform_1, window_bounds = array<i64: 192, 32>}, {pipeline_mode = #tpu.pipeline_mode<synchronous>, transform_indices = @transform_2, window_bounds = array<i64: 1, 32>}, {pipeline_mode = #tpu.pipeline_mode<synchronous>, transform_indices = @transform_3, window_bounds = array<i64: 96, 16>}, {pipeline_mode = #tpu.pipeline_mode<synchronous>, transform_indices = @transform_4, window_bounds = array<i64: 1, 16>}, {pipeline_mode = #tpu.pipeline_mode<synchronous>, transform_indices = @transform_5, window_bounds = array<i64: 48, 8>}, {pipeline_mode = #tpu.pipeline_mode<synchronous>, transform_indices = @transform_6, window_bounds = array<i64: 1, 8>}, {pipeline_mode = #tpu.pipeline_mode<synchronous>, transform_indices = @transform_7, window_bounds = array<i64: 24, 16>}, {pipeline_mode = #tpu.pipeline_mode<synchronous>, transform_indices = @transform_8, window_bounds = array<i64: 1, 16>}, {pipeline_mode = #tpu.pipeline_mode<synchronous>, transform_indices = @transform_9, window_bounds = array<i64: 32, 32>}, {pipeline_mode = #tpu.pipeline_mode<synchronous>, transform_indices = @transform_10, window_bounds = array<i64: 32, 32>}, {pipeline_mode = #tpu.pipeline_mode<synchronous>, transform_indices = @transform_11, window_bounds = array<i64: 1, 32>}, {pipeline_mode = #tpu.pipeline_mode<synchronous>, transform_indices = @transform_12, window_bounds = array<i64: 96, 128>}, {pipeline_mode = #tpu.pipeline_mode<synchronous>, transform_indices = @transform_13, window_bounds = array<i64: 1, 128>}, {transform_indices = @transform_14, window_bounds = array<i64: 2, 8, 128>}]} {
    %c0 = arith.constant 0 : index
    %c0_0 = arith.constant 0 : index
    %c0_1 = arith.constant 0 : index
    %0 = vector.load %arg1[%c0, %c0_0, %c0_1] : memref<2x32x64xf32, #tpu.memory_space<vmem>>, vector<2x32x64xf32>
    %cst = arith.constant 0.000000e+00 : f32
    %1 = vector.broadcast %cst : f32 to vector<2x1x64xf32>
    %2 = vector.extract_strided_slice %0 {offsets = [0, 0, 0], sizes = [2, 31, 64], strides = [1, 1, 1]} : vector<2x32x64xf32> to vector<2x31x64xf32>
    %3 = tpu.concatenate %1, %2 in 1 : vector<2x1x64xf32>, vector<2x31x64xf32> -> vector<2x32x64xf32>
    %cst_2 = arith.constant 0.000000e+00 : f32
    %4 = vector.broadcast %cst_2 : f32 to vector<2x1x64xf32>
    %5 = vector.extract_strided_slice %0 {offsets = [0, 1, 0], sizes = [2, 31, 64], strides = [1, 1, 1]} : vector<2x32x64xf32> to vector<2x31x64xf32>
    %6 = tpu.concatenate %5, %4 in 1 : vector<2x31x64xf32>, vector<2x1x64xf32> -> vector<2x32x64xf32>
    %7 = tpu.concatenate %3, %0, %6 in 2 : vector<2x32x64xf32>, vector<2x32x64xf32>, vector<2x32x64xf32> -> vector<2x32x192xf32>
    %c0_3 = arith.constant 0 : index
    %c0_4 = arith.constant 0 : index
    %8 = vector.load %arg2[%c0_3, %c0_4] : memref<192x32xf32, #tpu.memory_space<vmem>>, vector<192x32xf32>
    %cst_5 = arith.constant dense<0.000000e+00> : vector<2x32x32xf32>
    %9 = tpu.matmul %7, %8, %cst_5 {dimension_numbers = #tpu.dot_dimension_numbers<[2], [0], [0, 1], [1], [0, 0, 0, 1, 1, 1], [], []>} : vector<2x32x192xf32>, vector<192x32xf32>, vector<2x32x32xf32> -> vector<2x32x32xf32>
    %c0_6 = arith.constant 0 : index
    %c0_7 = arith.constant 0 : index
    %10 = vector.load %arg3[%c0_6, %c0_7] : memref<1x32xf32, #tpu.memory_space<vmem>>, vector<1x32xf32>
    %11 = vector.shape_cast %10 : vector<1x32xf32> to vector<1x1x32xf32>
    %12 = vector.broadcast %11 : vector<1x1x32xf32> to vector<2x32x32xf32>
    %13 = arith.addf %9, %12 : vector<2x32x32xf32>
    %cst_8 = arith.constant 0.000000e+00 : f32
    %14 = vector.broadcast %cst_8 : f32 to vector<2x32x32xf32>
    %15 = arith.maximumf %13, %14 : vector<2x32x32xf32>
    %16 = vector.shape_cast %15 : vector<2x32x32xf32> to vector<2x16x2x32xf32>
    %17 = vector.extract_strided_slice %16 {offsets = [0, 0, 0, 0], sizes = [2, 16, 1, 32], strides = [1, 1, 1, 1]} : vector<2x16x2x32xf32> to vector<2x16x1x32xf32>
    %18 = vector.shape_cast %17 : vector<2x16x1x32xf32> to vector<2x16x32xf32>
    %19 = vector.extract_strided_slice %16 {offsets = [0, 0, 1, 0], sizes = [2, 16, 1, 32], strides = [1, 1, 1, 1]} : vector<2x16x2x32xf32> to vector<2x16x1x32xf32>
    %20 = vector.shape_cast %19 : vector<2x16x1x32xf32> to vector<2x16x32xf32>
    %21 = arith.maximumf %18, %20 : vector<2x16x32xf32>
    %cst_9 = arith.constant 0.000000e+00 : f32
    %22 = vector.broadcast %cst_9 : f32 to vector<2x1x32xf32>
    %23 = vector.extract_strided_slice %21 {offsets = [0, 0, 0], sizes = [2, 15, 32], strides = [1, 1, 1]} : vector<2x16x32xf32> to vector<2x15x32xf32>
    %24 = tpu.concatenate %22, %23 in 1 : vector<2x1x32xf32>, vector<2x15x32xf32> -> vector<2x16x32xf32>
    %cst_10 = arith.constant 0.000000e+00 : f32
    %25 = vector.broadcast %cst_10 : f32 to vector<2x1x32xf32>
    %26 = vector.extract_strided_slice %21 {offsets = [0, 1, 0], sizes = [2, 15, 32], strides = [1, 1, 1]} : vector<2x16x32xf32> to vector<2x15x32xf32>
    %27 = tpu.concatenate %26, %25 in 1 : vector<2x15x32xf32>, vector<2x1x32xf32> -> vector<2x16x32xf32>
    %28 = tpu.concatenate %24, %21, %27 in 2 : vector<2x16x32xf32>, vector<2x16x32xf32>, vector<2x16x32xf32> -> vector<2x16x96xf32>
    %c0_11 = arith.constant 0 : index
    %c0_12 = arith.constant 0 : index
    %29 = vector.load %arg4[%c0_11, %c0_12] : memref<96x16xf32, #tpu.memory_space<vmem>>, vector<96x16xf32>
    %cst_13 = arith.constant dense<0.000000e+00> : vector<2x16x16xf32>
    %30 = tpu.matmul %28, %29, %cst_13 {dimension_numbers = #tpu.dot_dimension_numbers<[2], [0], [0, 1], [1], [0, 0, 0, 1, 1, 1], [], []>} : vector<2x16x96xf32>, vector<96x16xf32>, vector<2x16x16xf32> -> vector<2x16x16xf32>
    %c0_14 = arith.constant 0 : index
    %c0_15 = arith.constant 0 : index
    %31 = vector.load %arg5[%c0_14, %c0_15] : memref<1x16xf32, #tpu.memory_space<vmem>>, vector<1x16xf32>
    %32 = vector.shape_cast %31 : vector<1x16xf32> to vector<1x1x16xf32>
    %33 = vector.broadcast %32 : vector<1x1x16xf32> to vector<2x16x16xf32>
    %34 = arith.addf %30, %33 : vector<2x16x16xf32>
    %cst_16 = arith.constant 0.000000e+00 : f32
    %35 = vector.broadcast %cst_16 : f32 to vector<2x16x16xf32>
    %36 = arith.maximumf %34, %35 : vector<2x16x16xf32>
    %37 = vector.shape_cast %36 : vector<2x16x16xf32> to vector<2x8x2x16xf32>
    %38 = vector.extract_strided_slice %37 {offsets = [0, 0, 0, 0], sizes = [2, 8, 1, 16], strides = [1, 1, 1, 1]} : vector<2x8x2x16xf32> to vector<2x8x1x16xf32>
    %39 = vector.shape_cast %38 : vector<2x8x1x16xf32> to vector<2x8x16xf32>
    %40 = vector.extract_strided_slice %37 {offsets = [0, 0, 1, 0], sizes = [2, 8, 1, 16], strides = [1, 1, 1, 1]} : vector<2x8x2x16xf32> to vector<2x8x1x16xf32>
    %41 = vector.shape_cast %40 : vector<2x8x1x16xf32> to vector<2x8x16xf32>
    %42 = arith.maximumf %39, %41 : vector<2x8x16xf32>
    %cst_17 = arith.constant 0.000000e+00 : f32
    %43 = vector.broadcast %cst_17 : f32 to vector<2x1x16xf32>
    %44 = vector.extract_strided_slice %42 {offsets = [0, 0, 0], sizes = [2, 7, 16], strides = [1, 1, 1]} : vector<2x8x16xf32> to vector<2x7x16xf32>
    %45 = tpu.concatenate %43, %44 in 1 : vector<2x1x16xf32>, vector<2x7x16xf32> -> vector<2x8x16xf32>
    %cst_18 = arith.constant 0.000000e+00 : f32
    %46 = vector.broadcast %cst_18 : f32 to vector<2x1x16xf32>
    %47 = vector.extract_strided_slice %42 {offsets = [0, 1, 0], sizes = [2, 7, 16], strides = [1, 1, 1]} : vector<2x8x16xf32> to vector<2x7x16xf32>
    %48 = tpu.concatenate %47, %46 in 1 : vector<2x7x16xf32>, vector<2x1x16xf32> -> vector<2x8x16xf32>
    %49 = tpu.concatenate %45, %42, %48 in 2 : vector<2x8x16xf32>, vector<2x8x16xf32>, vector<2x8x16xf32> -> vector<2x8x48xf32>
    %c0_19 = arith.constant 0 : index
    %c0_20 = arith.constant 0 : index
    %50 = vector.load %arg6[%c0_19, %c0_20] : memref<48x8xf32, #tpu.memory_space<vmem>>, vector<48x8xf32>
    %cst_21 = arith.constant dense<0.000000e+00> : vector<2x8x8xf32>
    %51 = tpu.matmul %49, %50, %cst_21 {dimension_numbers = #tpu.dot_dimension_numbers<[2], [0], [0, 1], [1], [0, 0, 0, 1, 1, 1], [], []>} : vector<2x8x48xf32>, vector<48x8xf32>, vector<2x8x8xf32> -> vector<2x8x8xf32>
    %c0_22 = arith.constant 0 : index
    %c0_23 = arith.constant 0 : index
    %52 = vector.load %arg7[%c0_22, %c0_23] : memref<1x8xf32, #tpu.memory_space<vmem>>, vector<1x8xf32>
    %53 = vector.shape_cast %52 : vector<1x8xf32> to vector<1x1x8xf32>
    %54 = vector.broadcast %53 : vector<1x1x8xf32> to vector<2x8x8xf32>
    %55 = arith.addf %51, %54 : vector<2x8x8xf32>
    %cst_24 = arith.constant 0.000000e+00 : f32
    %56 = vector.broadcast %cst_24 : f32 to vector<2x8x8xf32>
    %57 = arith.maximumf %55, %56 : vector<2x8x8xf32>
    %58 = vector.shape_cast %57 : vector<2x8x8xf32> to vector<2x4x2x8xf32>
    %59 = vector.extract_strided_slice %58 {offsets = [0, 0, 0, 0], sizes = [2, 4, 1, 8], strides = [1, 1, 1, 1]} : vector<2x4x2x8xf32> to vector<2x4x1x8xf32>
    %60 = vector.shape_cast %59 : vector<2x4x1x8xf32> to vector<2x4x8xf32>
    %61 = vector.extract_strided_slice %58 {offsets = [0, 0, 1, 0], sizes = [2, 4, 1, 8], strides = [1, 1, 1, 1]} : vector<2x4x2x8xf32> to vector<2x4x1x8xf32>
    %62 = vector.shape_cast %61 : vector<2x4x1x8xf32> to vector<2x4x8xf32>
    %63 = arith.maximumf %60, %62 : vector<2x4x8xf32>
    %cst_25 = arith.constant 0.000000e+00 : f32
    %64 = vector.broadcast %cst_25 : f32 to vector<2x1x8xf32>
    %65 = vector.extract_strided_slice %63 {offsets = [0, 0, 0], sizes = [2, 3, 8], strides = [1, 1, 1]} : vector<2x4x8xf32> to vector<2x3x8xf32>
    %66 = tpu.concatenate %64, %65 in 1 : vector<2x1x8xf32>, vector<2x3x8xf32> -> vector<2x4x8xf32>
    %cst_26 = arith.constant 0.000000e+00 : f32
    %67 = vector.broadcast %cst_26 : f32 to vector<2x1x8xf32>
    %68 = vector.extract_strided_slice %63 {offsets = [0, 1, 0], sizes = [2, 3, 8], strides = [1, 1, 1]} : vector<2x4x8xf32> to vector<2x3x8xf32>
    %69 = tpu.concatenate %68, %67 in 1 : vector<2x3x8xf32>, vector<2x1x8xf32> -> vector<2x4x8xf32>
    %70 = tpu.concatenate %66, %63, %69 in 2 : vector<2x4x8xf32>, vector<2x4x8xf32>, vector<2x4x8xf32> -> vector<2x4x24xf32>
    %c0_27 = arith.constant 0 : index
    %c0_28 = arith.constant 0 : index
    %71 = vector.load %arg8[%c0_27, %c0_28] : memref<24x16xf32, #tpu.memory_space<vmem>>, vector<24x16xf32>
    %cst_29 = arith.constant dense<0.000000e+00> : vector<2x4x16xf32>
    %72 = tpu.matmul %70, %71, %cst_29 {dimension_numbers = #tpu.dot_dimension_numbers<[2], [0], [0, 1], [1], [0, 0, 0, 1, 1, 1], [], []>} : vector<2x4x24xf32>, vector<24x16xf32>, vector<2x4x16xf32> -> vector<2x4x16xf32>
    %c0_30 = arith.constant 0 : index
    %c0_31 = arith.constant 0 : index
    %73 = vector.load %arg9[%c0_30, %c0_31] : memref<1x16xf32, #tpu.memory_space<vmem>>, vector<1x16xf32>
    %74 = vector.shape_cast %73 : vector<1x16xf32> to vector<1x1x16xf32>
    %75 = vector.broadcast %74 : vector<1x1x16xf32> to vector<2x4x16xf32>
    %76 = arith.addf %72, %75 : vector<2x4x16xf32>
    %cst_32 = arith.constant 0.000000e+00 : f32
    %77 = vector.broadcast %cst_32 : f32 to vector<2x4x16xf32>
    %78 = arith.maximumf %76, %77 : vector<2x4x16xf32>
    %cst_33 = arith.constant 0.000000e+00 : f32
    %79 = vector.broadcast %cst_33 : f32 to vector<2x1x16xf32>
    %80 = vector.extract_strided_slice %78 {offsets = [0, 0, 0], sizes = [2, 3, 16], strides = [1, 1, 1]} : vector<2x4x16xf32> to vector<2x3x16xf32>
    %81 = tpu.concatenate %79, %80 in 1 : vector<2x1x16xf32>, vector<2x3x16xf32> -> vector<2x4x16xf32>
    %82 = tpu.concatenate %81, %78 in 2 : vector<2x4x16xf32>, vector<2x4x16xf32> -> vector<2x4x32xf32>
    %cst_34 = arith.constant 0.000000e+00 : f32
    %83 = vector.broadcast %cst_34 : f32 to vector<2x1x16xf32>
    %84 = vector.extract_strided_slice %78 {offsets = [0, 1, 0], sizes = [2, 3, 16], strides = [1, 1, 1]} : vector<2x4x16xf32> to vector<2x3x16xf32>
    %85 = tpu.concatenate %84, %83 in 1 : vector<2x3x16xf32>, vector<2x1x16xf32> -> vector<2x4x16xf32>
    %86 = tpu.concatenate %78, %85 in 2 : vector<2x4x16xf32>, vector<2x4x16xf32> -> vector<2x4x32xf32>
    %c0_35 = arith.constant 0 : index
    %c0_36 = arith.constant 0 : index
    %87 = vector.load %arg10[%c0_35, %c0_36] : memref<32x32xf32, #tpu.memory_space<vmem>>, vector<32x32xf32>
    %cst_37 = arith.constant dense<0.000000e+00> : vector<2x4x32xf32>
    %88 = tpu.matmul %82, %87, %cst_37 {dimension_numbers = #tpu.dot_dimension_numbers<[2], [0], [0, 1], [1], [0, 0, 0, 1, 1, 1], [], []>} : vector<2x4x32xf32>, vector<32x32xf32>, vector<2x4x32xf32> -> vector<2x4x32xf32>
    %c0_38 = arith.constant 0 : index
    %c0_39 = arith.constant 0 : index
    %89 = vector.load %arg12[%c0_38, %c0_39] : memref<1x32xf32, #tpu.memory_space<vmem>>, vector<1x32xf32>
    %90 = vector.shape_cast %89 : vector<1x32xf32> to vector<1x1x32xf32>
    %91 = vector.broadcast %90 : vector<1x1x32xf32> to vector<2x4x32xf32>
    %92 = arith.addf %88, %91 : vector<2x4x32xf32>
    %c0_40 = arith.constant 0 : index
    %c0_41 = arith.constant 0 : index
    %93 = vector.load %arg11[%c0_40, %c0_41] : memref<32x32xf32, #tpu.memory_space<vmem>>, vector<32x32xf32>
    %cst_42 = arith.constant dense<0.000000e+00> : vector<2x4x32xf32>
    %94 = tpu.matmul %86, %93, %cst_42 {dimension_numbers = #tpu.dot_dimension_numbers<[2], [0], [0, 1], [1], [0, 0, 0, 1, 1, 1], [], []>} : vector<2x4x32xf32>, vector<32x32xf32>, vector<2x4x32xf32> -> vector<2x4x32xf32>
    %c0_43 = arith.constant 0 : index
    %c0_44 = arith.constant 0 : index
    %95 = vector.load %arg12[%c0_43, %c0_44] : memref<1x32xf32, #tpu.memory_space<vmem>>, vector<1x32xf32>
    %96 = vector.shape_cast %95 : vector<1x32xf32> to vector<1x1x32xf32>
    %97 = vector.broadcast %96 : vector<1x1x32xf32> to vector<2x4x32xf32>
    %98 = arith.addf %94, %97 : vector<2x4x32xf32>
    %cst_45 = arith.constant 0.000000e+00 : f32
    %99 = vector.broadcast %cst_45 : f32 to vector<2x4x32xf32>
    %100 = arith.maximumf %92, %99 : vector<2x4x32xf32>
    %cst_46 = arith.constant 0.000000e+00 : f32
    %101 = vector.broadcast %cst_46 : f32 to vector<2x4x32xf32>
    %102 = arith.maximumf %98, %101 : vector<2x4x32xf32>
    %103 = vector.shape_cast %100 : vector<2x4x32xf32> to vector<2x4x1x32xf32>
    %104 = vector.shape_cast %102 : vector<2x4x32xf32> to vector<2x4x1x32xf32>
    %105 = tpu.concatenate %103, %104 in 2 : vector<2x4x1x32xf32>, vector<2x4x1x32xf32> -> vector<2x4x2x32xf32>
    %106 = vector.shape_cast %105 : vector<2x4x2x32xf32> to vector<2x8x32xf32>
    %cst_47 = arith.constant 0.000000e+00 : f32
    %107 = vector.broadcast %cst_47 : f32 to vector<2x1x32xf32>
    %108 = vector.extract_strided_slice %106 {offsets = [0, 0, 0], sizes = [2, 7, 32], strides = [1, 1, 1]} : vector<2x8x32xf32> to vector<2x7x32xf32>
    %109 = tpu.concatenate %107, %108 in 1 : vector<2x1x32xf32>, vector<2x7x32xf32> -> vector<2x8x32xf32>
    %cst_48 = arith.constant 0.000000e+00 : f32
    %110 = vector.broadcast %cst_48 : f32 to vector<2x1x32xf32>
    %111 = vector.extract_strided_slice %106 {offsets = [0, 1, 0], sizes = [2, 7, 32], strides = [1, 1, 1]} : vector<2x8x32xf32> to vector<2x7x32xf32>
    %112 = tpu.concatenate %111, %110 in 1 : vector<2x7x32xf32>, vector<2x1x32xf32> -> vector<2x8x32xf32>
    %113 = tpu.concatenate %109, %106, %112 in 2 : vector<2x8x32xf32>, vector<2x8x32xf32>, vector<2x8x32xf32> -> vector<2x8x96xf32>
    %c0_49 = arith.constant 0 : index
    %c0_50 = arith.constant 0 : index
    %114 = vector.load %arg13[%c0_49, %c0_50] : memref<96x128xf32, #tpu.memory_space<vmem>>, vector<96x128xf32>
    %cst_51 = arith.constant dense<0.000000e+00> : vector<2x8x128xf32>
    %115 = tpu.matmul %113, %114, %cst_51 {dimension_numbers = #tpu.dot_dimension_numbers<[2], [0], [0, 1], [1], [0, 0, 0, 1, 1, 1], [], []>} : vector<2x8x96xf32>, vector<96x128xf32>, vector<2x8x128xf32> -> vector<2x8x128xf32>
    %c0_52 = arith.constant 0 : index
    %c0_53 = arith.constant 0 : index
    %116 = vector.load %arg14[%c0_52, %c0_53] : memref<1x128xf32, #tpu.memory_space<vmem>>, vector<1x128xf32>
    %117 = vector.shape_cast %116 : vector<1x128xf32> to vector<1x1x128xf32>
    %118 = vector.broadcast %117 : vector<1x1x128xf32> to vector<2x8x128xf32>
    %119 = arith.addf %115, %118 : vector<2x8x128xf32>
    %120 = arith.negf %119 : vector<2x8x128xf32>
    %121 = math.exp %120 : vector<2x8x128xf32>
    %cst_54 = arith.constant 1.000000e+00 : f32
    %122 = vector.broadcast %cst_54 : f32 to vector<2x8x128xf32>
    %123 = arith.addf %122, %121 : vector<2x8x128xf32>
    %124 = arith.divf %122, %123 : vector<2x8x128xf32>
    %c0_55 = arith.constant 0 : index
    %c0_56 = arith.constant 0 : index
    %c0_57 = arith.constant 0 : index
    %125 = vector.load %arg15[%c0_55, %c0_56, %c0_57] : memref<2x8x128xf32, #tpu.memory_space<vmem>>, vector<2x8x128xf32>
    tpu.vector_store %arg15[%c0_55, %c0_56, %c0_57], %124 {strides = array<i32>} : memref<2x8x128xf32, #tpu.memory_space<vmem>>, vector<2x8x128xf32>,
    return
  }
  func.func @transform_0(%arg0: i32) -> (i32, i32, i32) {
    %c0_i32 = arith.constant 0 : i32
    %c0_i32_0 = arith.constant 0 : i32
    %c0_i32_1 = arith.constant 0 : i32
    return %arg0, %c0_i32, %c0_i32_0 : i32, i32, i32
  }
  func.func @transform_1(%arg0: i32) -> (i32, i32) {
    %c0_i32 = arith.constant 0 : i32
    %c0_i32_0 = arith.constant 0 : i32
    %c0_i32_1 = arith.constant 0 : i32
    return %c0_i32, %c0_i32_0 : i32, i32
  }
  func.func @transform_2(%arg0: i32) -> (i32, i32) {
    %c0_i32 = arith.constant 0 : i32
    %c0_i32_0 = arith.constant 0 : i32
    %c0_i32_1 = arith.constant 0 : i32
    return %c0_i32, %c0_i32_0 : i32, i32
  }
  func.func @transform_3(%arg0: i32) -> (i32, i32) {
    %c0_i32 = arith.constant 0 : i32
    %c0_i32_0 = arith.constant 0 : i32
    %c0_i32_1 = arith.constant 0 : i32
    return %c0_i32, %c0_i32_0 : i32, i32
  }
  func.func @transform_4(%arg0: i32) -> (i32, i32) {
    %c0_i32 = arith.constant 0 : i32
    %c0_i32_0 = arith.constant 0 : i32
    %c0_i32_1 = arith.constant 0 : i32
    return %c0_i32, %c0_i32_0 : i32, i32
  }
  func.func @transform_5(%arg0: i32) -> (i32, i32) {
    %c0_i32 = arith.constant 0 : i32
    %c0_i32_0 = arith.constant 0 : i32
    %c0_i32_1 = arith.constant 0 : i32
    return %c0_i32, %c0_i32_0 : i32, i32
  }
  func.func @transform_6(%arg0: i32) -> (i32, i32) {
    %c0_i32 = arith.constant 0 : i32
    %c0_i32_0 = arith.constant 0 : i32
    %c0_i32_1 = arith.constant 0 : i32
    return %c0_i32, %c0_i32_0 : i32, i32
  }
  func.func @transform_7(%arg0: i32) -> (i32, i32) {
    %c0_i32 = arith.constant 0 : i32
    %c0_i32_0 = arith.constant 0 : i32
    %c0_i32_1 = arith.constant 0 : i32
    return %c0_i32, %c0_i32_0 : i32, i32
  }
  func.func @transform_8(%arg0: i32) -> (i32, i32) {
    %c0_i32 = arith.constant 0 : i32
    %c0_i32_0 = arith.constant 0 : i32
    %c0_i32_1 = arith.constant 0 : i32
    return %c0_i32, %c0_i32_0 : i32, i32
  }
  func.func @transform_9(%arg0: i32) -> (i32, i32) {
    %c0_i32 = arith.constant 0 : i32
    %c0_i32_0 = arith.constant 0 : i32
    %c0_i32_1 = arith.constant 0 : i32
    return %c0_i32, %c0_i32_0 : i32, i32
  }
  func.func @transform_10(%arg0: i32) -> (i32, i32) {
    %c0_i32 = arith.constant 0 : i32
    %c0_i32_0 = arith.constant 0 : i32
    %c0_i32_1 = arith.constant 0 : i32
    return %c0_i32, %c0_i32_0 : i32, i32
  }
  func.func @transform_11(%arg0: i32) -> (i32, i32) {
    %c0_i32 = arith.constant 0 : i32
    %c0_i32_0 = arith.constant 0 : i32
    %c0_i32_1 = arith.constant 0 : i32
    return %c0_i32, %c0_i32_0 : i32, i32
  }
  func.func @transform_12(%arg0: i32) -> (i32, i32) {
    %c0_i32 = arith.constant 0 : i32
    %c0_i32_0 = arith.constant 0 : i32
    %c0_i32_1 = arith.constant 0 : i32
    return %c0_i32, %c0_i32_0 : i32, i32
  }
  func.func @transform_13(%arg0: i32) -> (i32, i32) {
    %c0_i32 = arith.constant 0 : i32
    %c0_i32_0 = arith.constant 0 : i32
    %c0_i32_1 = arith.constant 0 : i32
    return %c0_i32, %c0_i32_0 : i32, i32
  }
  func.func @transform_14(%arg0: i32) -> (i32, i32, i32) {
    %c0_i32 = arith.constant 0 : i32
    %c0_i32_0 = arith.constant 0 : i32
    %c0_i32_1 = arith.constant 0 : i32
    return %arg0, %c0_i32, %c0_i32_0 : i32, i32, i32
  }
}

</mosaic_0001>

<llo_original>
// kernel: autoencoder_forward.1
$region0: #{autoencoder_forward.1}
  #allocation0 [shape = 'u32[]', space=smem, size = 0x4, offset = 0x4, fixed_abs, tag = 'smem constant byte address 0x4 - core index']
  #allocation1 [shape = 'u32[144,128]{1,0:T(1,128)}', space=vmem, size = 0x12000, scoped, tag = 'internal scratch']
  %s0 = inlined_call_operand.vmem [shape: f32[4,32,64], index: 0, kind: input, shape index: {}]
  %s1 = inlined_call_operand.vmem [shape: f32[192,32], index: 1, kind: input, shape index: {}]
  %s2 = inlined_call_operand.vmem [shape: f32[1,32], index: 2, kind: input, shape index: {}]
  %s3 = inlined_call_operand.vmem [shape: f32[96,16], index: 3, kind: input, shape index: {}]
  %s4 = inlined_call_operand.vmem [shape: f32[1,16], index: 4, kind: input, shape index: {}]
  %s5 = inlined_call_operand.vmem [shape: f32[48,8], index: 5, kind: input, shape index: {}]
  %s6 = inlined_call_operand.vmem [shape: f32[1,8], index: 6, kind: input, shape index: {}]
  %s7 = inlined_call_operand.vmem [shape: f32[24,16], index: 7, kind: input, shape index: {}]
  %s8 = inlined_call_operand.vmem [shape: f32[1,16], index: 8, kind: input, shape index: {}]
  %s9 = inlined_call_operand.vmem [shape: f32[32,32], index: 9, kind: input, shape index: {}]
  %s10 = inlined_call_operand.vmem [shape: f32[32,32], index: 10, kind: input, shape index: {}]
  %s11 = inlined_call_operand.vmem [shape: f32[1,32], index: 11, kind: input, shape index: {}]
  %s12 = inlined_call_operand.vmem [shape: f32[96,128], index: 12, kind: input, shape index: {}]
  %s13 = inlined_call_operand.vmem [shape: f32[1,128], index: 13, kind: input, shape index: {}]
  %s14 = inlined_call_operand.vmem [shape: f32[4,8,128], index: 14, kind: output, shape index: {}]
  %s15 = sld [smem:[#allocation0]]
  $region89: #{autoencoder_forward.1} parent=0
    _
  %s17 = ssub.s32 1, %s15
  %s18 = scalar_select 0, %s17, %s15
  loop: start=0, step=1, limit=4
  $region2: #{autoencoder_forward.1} parent=0 // loop_pre_header
    _
  $region3: #{autoencoder_forward.1} parent=0 // loop_header
    %s20 = sphi 0, %s24
    %p21 = scmp.ge.s32.totalorder %s20, 4
    %s30 = sphi 0, %s32
    %s33 = sphi 0, %s30
    %s34 = sphi 0, %s33
    %s50 = sphi 0, %s34
    %s54 = sphi 0, %s54
    %s56 = sphi 0, %s54
    %s57 = sphi 0, %s56
    %s71 = sphi 0, %s57
    %s75 = sphi 0, %s75
    %s77 = sphi 0, %s75
    %s78 = sphi 0, %s77
    %s92 = sphi 0, %s78
    %s96 = sphi 0, %s96
    %s98 = sphi 0, %s96
    %s99 = sphi 0, %s98
    %s113 = sphi 0, %s99
    %s117 = sphi 0, %s117
    %s119 = sphi 0, %s117
    %s120 = sphi 0, %s119
    %s134 = sphi 0, %s120
    %s138 = sphi 0, %s138
    %s140 = sphi 0, %s138
    %s141 = sphi 0, %s140
    %s155 = sphi 0, %s141
    %s159 = sphi 0, %s159
    %s161 = sphi 0, %s159
    %s162 = sphi 0, %s161
    %s176 = sphi 0, %s162
    %s180 = sphi 0, %s180
    %s182 = sphi 0, %s180
    %s183 = sphi 0, %s182
    %s197 = sphi 0, %s183
    %s201 = sphi 0, %s201
    %s203 = sphi 0, %s201
    %s204 = sphi 0, %s203
    %s218 = sphi 0, %s204
    %s222 = sphi 0, %s222
    %s224 = sphi 0, %s222
    %s225 = sphi 0, %s224
    %s239 = sphi 0, %s225
    %s243 = sphi 0, %s243
    %s245 = sphi 0, %s243
    %s246 = sphi 0, %s245
    %s260 = sphi 0, %s246
    %s264 = sphi 0, %s264
    %s266 = sphi 0, %s264
    %s267 = sphi 0, %s266
    %s281 = sphi 0, %s267
    %s285 = sphi 0, %s285
    %s287 = sphi 0, %s285
    %s288 = sphi 0, %s287
    %s302 = sphi 0, %s288
    %s306 = sphi 0, %s306
    %s308 = sphi 0, %s306
    %s309 = sphi 0, %s308
    %s323 = sphi 0, %s309
    %s329 = sphi 0, %s331
    %s332 = sphi 0, %s329
    %s333 = sphi 0, %s332
    %s349 = sphi 0, %s333
  $region4: #{autoencoder_forward.1} parent=0 // loop_header_branch
    %23 = sbr.rel (%p21) target = $region8
  $region5: #{autoencoder_forward.1} parent=0 // loop_body
    %s25 = ssub.s32 %s20, 1
    %s26 = ssub.s32 %s20, 2
    %s27 = sadd.s32 %s20, 1
    %s28 = ssub.s32 %s20, %s27
    %p29 = scmp.eq.s32.totalorder %s28, 0
    %s31 = sadd.s32 %s30, 1
    %s32 = scalar_select %p29, %s30, %s31
    %p35 = pneg %p29
    %p36 = scmp.eq.s32.totalorder %s20, 1
    %p37 = por %p35, %p36
    %p38 = scmp.ne.s32.totalorder %s30, %s33
    %p39 = scmp.eq.s32.totalorder %s20, 0
    %p40 = por %p38, %p39
    %p41 = scmp.ne.s32.totalorder %s30, %s33
    %p42 = scmp.eq.s32.totalorder %s25, 1
    %p43 = por %p41, %p42
    %p44 = scmp.ne.s32.totalorder %s33, %s34
    %p45 = scmp.eq.s32.totalorder %s25, 0
    %p46 = por %p44, %p45
    %p47 = scmp.ne.s32.totalorder %s33, %s34
    %p48 = scmp.eq.s32.totalorder %s26, 1
    %p49 = por %p47, %p48
    %p51 = scmp.ne.s32.totalorder %s34, %s50
    %p52 = scmp.eq.s32.totalorder %s26, 0
    %p53 = por %p51, %p52
    %s55 = sadd.s32 %s54, 1
    %p58 = scmp.eq.s32.totalorder %s20, 1
    %p59 = scmp.ne.s32.totalorder %s54, %s56
    %p60 = scmp.eq.s32.totalorder %s20, 0
    %p61 = por %p59, %p60
    %p62 = scmp.ne.s32.totalorder %s54, %s56
    %p63 = scmp.eq.s32.totalorder %s25, 1
    %p64 = por %p62, %p63
    %p65 = scmp.ne.s32.totalorder %s56, %s57
    %p66 = scmp.eq.s32.totalorder %s25, 0
    %p67 = por %p65, %p66
    %p68 = scmp.ne.s32.totalorder %s56, %s57
    %p69 = scmp.eq.s32.totalorder %s26, 1
    %p70 = por %p68, %p69
    %p72 = scmp.ne.s32.totalorder %s57, %s71
    %p73 = scmp.eq.s32.totalorder %s26, 0
    %p74 = por %p72, %p73
    %s76 = sadd.s32 %s75, 1
    %p79 = scmp.eq.s32.totalorder %s20, 1
    %p80 = scmp.ne.s32.totalorder %s75, %s77
    %p81 = scmp.eq.s32.totalorder %s20, 0
    %p82 = por %p80, %p81
    %p83 = scmp.ne.s32.totalorder %s75, %s77
    %p84 = scmp.eq.s32.totalorder %s25, 1
    %p85 = por %p83, %p84
    %p86 = scmp.ne.s32.totalorder %s77, %s78
    %p87 = scmp.eq.s32.totalorder %s25, 0
    %p88 = por %p86, %p87
    %p89 = scmp.ne.s32.totalorder %s77, %s78
    %p90 = scmp.eq.s32.totalorder %s26, 1
    %p91 = por %p89, %p90
    %p93 = scmp.ne.s32.totalorder %s78, %s92
    %p94 = scmp.eq.s32.totalorder %s26, 0
    %p95 = por %p93, %p94
    %s97 = sadd.s32 %s96, 1
    %p100 = scmp.eq.s32.totalorder %s20, 1
    %p101 = scmp.ne.s32.totalorder %s96, %s98
    %p102 = scmp.eq.s32.totalorder %s20, 0
    %p103 = por %p101, %p102
    %p104 = scmp.ne.s32.totalorder %s96, %s98
    %p105 = scmp.eq.s32.totalorder %s25, 1
    %p106 = por %p104, %p105
    %p107 = scmp.ne.s32.totalorder %s98, %s99
    %p108 = scmp.eq.s32.totalorder %s25, 0
    %p109 = por %p107, %p108
    %p110 = scmp.ne.s32.totalorder %s98, %s99
    %p111 = scmp.eq.s32.totalorder %s26, 1
    %p112 = por %p110, %p111
    %p114 = scmp.ne.s32.totalorder %s99, %s113
    %p115 = scmp.eq.s32.totalorder %s26, 0
    %p116 = por %p114, %p115
    %s118 = sadd.s32 %s117, 1
    %p121 = scmp.eq.s32.totalorder %s20, 1
    %p122 = scmp.ne.s32.totalorder %s117, %s119
    %p123 = scmp.eq.s32.totalorder %s20, 0
    %p124 = por %p122, %p123
    %p125 = scmp.ne.s32.totalorder %s117, %s119
    %p126 = scmp.eq.s32.totalorder %s25, 1
    %p127 = por %p125, %p126
    %p128 = scmp.ne.s32.totalorder %s119, %s120
    %p129 = scmp.eq.s32.totalorder %s25, 0
    %p130 = por %p128, %p129
    %p131 = scmp.ne.s32.totalorder %s119, %s120
    %p132 = scmp.eq.s32.totalorder %s26, 1
    %p133 = por %p131, %p132
    %p135 = scmp.ne.s32.totalorder %s120, %s134
    %p136 = scmp.eq.s32.totalorder %s26, 0
    %p137 = por %p135, %p136
    %s139 = sadd.s32 %s138, 1
    %p142 = scmp.eq.s32.totalorder %s20, 1
    %p143 = scmp.ne.s32.totalorder %s138, %s140
    %p144 = scmp.eq.s32.totalorder %s20, 0
    %p145 = por %p143, %p144
    %p146 = scmp.ne.s32.totalorder %s138, %s140
    %p147 = scmp.eq.s32.totalorder %s25, 1
    %p148 = por %p146, %p147
    %p149 = scmp.ne.s32.totalorder %s140, %s141
    %p150 = scmp.eq.s32.totalorder %s25, 0
    %p151 = por %p149, %p150
    %p152 = scmp.ne.s32.totalorder %s140, %s141
    %p153 = scmp.eq.s32.totalorder %s26, 1
    %p154 = por %p152, %p153
    %p156 = scmp.ne.s32.totalorder %s141, %s155
    %p157 = scmp.eq.s32.totalorder %s26, 0
    %p158 = por %p156, %p157
    %s160 = sadd.s32 %s159, 1
    %p163 = scmp.eq.s32.totalorder %s20, 1
    %p164 = scmp.ne.s32.totalorder %s159, %s161
    %p165 = scmp.eq.s32.totalorder %s20, 0
    %p166 = por %p164, %p165
    %p167 = scmp.ne.s32.totalorder %s159, %s161
    %p168 = scmp.eq.s32.totalorder %s25, 1
    %p169 = por %p167, %p168
    %p170 = scmp.ne.s32.totalorder %s161, %s162
    %p171 = scmp.eq.s32.totalorder %s25, 0
    %p172 = por %p170, %p171
    %p173 = scmp.ne.s32.totalorder %s161, %s162
    %p174 = scmp.eq.s32.totalorder %s26, 1
    %p175 = por %p173, %p174
    %p177 = scmp.ne.s32.totalorder %s162, %s176
    %p178 = scmp.eq.s32.totalorder %s26, 0
    %p179 = por %p177, %p178
    %s181 = sadd.s32 %s180, 1
    %p184 = scmp.eq.s32.totalorder %s20, 1
    %p185 = scmp.ne.s32.totalorder %s180, %s182
    %p186 = scmp.eq.s32.totalorder %s20, 0
    %p187 = por %p185, %p186
    %p188 = scmp.ne.s32.totalorder %s180, %s182
    %p189 = scmp.eq.s32.totalorder %s25, 1
    %p190 = por %p188, %p189
    %p191 = scmp.ne.s32.totalorder %s182, %s183
    %p192 = scmp.eq.s32.totalorder %s25, 0
    %p193 = por %p191, %p192
    %p194 = scmp.ne.s32.totalorder %s182, %s183
    %p195 = scmp.eq.s32.totalorder %s26, 1
    %p196 = por %p194, %p195
    %p198 = scmp.ne.s32.totalorder %s183, %s197
    %p199 = scmp.eq.s32.totalorder %s26, 0
    %p200 = por %p198, %p199
    %s202 = sadd.s32 %s201, 1
    %p205 = scmp.eq.s32.totalorder %s20, 1
    %p206 = scmp.ne.s32.totalorder %s201, %s203
    %p207 = scmp.eq.s32.totalorder %s20, 0
    %p208 = por %p206, %p207
    %p209 = scmp.ne.s32.totalorder %s201, %s203
    %p210 = scmp.eq.s32.totalorder %s25, 1
    %p211 = por %p209, %p210
    %p212 = scmp.ne.s32.totalorder %s203, %s204
    %p213 = scmp.eq.s32.totalorder %s25, 0
    %p214 = por %p212, %p213
    %p215 = scmp.ne.s32.totalorder %s203, %s204
    %p216 = scmp.eq.s32.totalorder %s26, 1
    %p217 = por %p215, %p216
    %p219 = scmp.ne.s32.totalorder %s204, %s218
    %p220 = scmp.eq.s32.totalorder %s26, 0
    %p221 = por %p219, %p220
    %s223 = sadd.s32 %s222, 1
    %p226 = scmp.eq.s32.totalorder %s20, 1
    %p227 = scmp.ne.s32.totalorder %s222, %s224
    %p228 = scmp.eq.s32.totalorder %s20, 0
    %p229 = por %p227, %p228
    %p230 = scmp.ne.s32.totalorder %s222, %s224
    %p231 = scmp.eq.s32.totalorder %s25, 1
    %p232 = por %p230, %p231
    %p233 = scmp.ne.s32.totalorder %s224, %s225
    %p234 = scmp.eq.s32.totalorder %s25, 0
    %p235 = por %p233, %p234
    %p236 = scmp.ne.s32.totalorder %s224, %s225
    %p237 = scmp.eq.s32.totalorder %s26, 1
    %p238 = por %p236, %p237
    %p240 = scmp.ne.s32.totalorder %s225, %s239
    %p241 = scmp.eq.s32.totalorder %s26, 0
    %p242 = por %p240, %p241
    %s244 = sadd.s32 %s243, 1
    %p247 = scmp.eq.s32.totalorder %s20, 1
    %p248 = scmp.ne.s32.totalorder %s243, %s245
    %p249 = scmp.eq.s32.totalorder %s20, 0
    %p250 = por %p248, %p249
    %p251 = scmp.ne.s32.totalorder %s243, %s245
    %p252 = scmp.eq.s32.totalorder %s25, 1
    %p253 = por %p251, %p252
    %p254 = scmp.ne.s32.totalorder %s245, %s246
    %p255 = scmp.eq.s32.totalorder %s25, 0
    %p256 = por %p254, %p255
    %p257 = scmp.ne.s32.totalorder %s245, %s246
    %p258 = scmp.eq.s32.totalorder %s26, 1
    %p259 = por %p257, %p258
    %p261 = scmp.ne.s32.totalorder %s246, %s260
    %p262 = scmp.eq.s32.totalorder %s26, 0
    %p263 = por %p261, %p262
    %s265 = sadd.s32 %s264, 1
    %p268 = scmp.eq.s32.totalorder %s20, 1
    %p269 = scmp.ne.s32.totalorder %s264, %s266
    %p270 = scmp.eq.s32.totalorder %s20, 0
    %p271 = por %p269, %p270
    %p272 = scmp.ne.s32.totalorder %s264, %s266
    %p273 = scmp.eq.s32.totalorder %s25, 1
    %p274 = por %p272, %p273
    %p275 = scmp.ne.s32.totalorder %s266, %s267
    %p276 = scmp.eq.s32.totalorder %s25, 0
    %p277 = por %p275, %p276
    %p278 = scmp.ne.s32.totalorder %s266, %s267
    %p279 = scmp.eq.s32.totalorder %s26, 1
    %p280 = por %p278, %p279
    %p282 = scmp.ne.s32.totalorder %s267, %s281
    %p283 = scmp.eq.s32.totalorder %s26, 0
    %p284 = por %p282, %p283
    %s286 = sadd.s32 %s285, 1
    %p289 = scmp.eq.s32.totalorder %s20, 1
    %p290 = scmp.ne.s32.totalorder %s285, %s287
    %p291 = scmp.eq.s32.totalorder %s20, 0
    %p292 = por %p290, %p291
    %p293 = scmp.ne.s32.totalorder %s285, %s287
    %p294 = scmp.eq.s32.totalorder %s25, 1
    %p295 = por %p293, %p294
    %p296 = scmp.ne.s32.totalorder %s287, %s288
    %p297 = scmp.eq.s32.totalorder %s25, 0
    %p298 = por %p296, %p297
    %p299 = scmp.ne.s32.totalorder %s287, %s288
    %p300 = scmp.eq.s32.totalorder %s26, 1
    %p301 = por %p299, %p300
    %p303 = scmp.ne.s32.totalorder %s288, %s302
    %p304 = scmp.eq.s32.totalorder %s26, 0
    %p305 = por %p303, %p304
    %s307 = sadd.s32 %s306, 1
    %p310 = scmp.eq.s32.totalorder %s20, 1
    %p311 = scmp.ne.s32.totalorder %s306, %s308
    %p312 = scmp.eq.s32.totalorder %s20, 0
    %p313 = por %p311, %p312
    %p314 = scmp.ne.s32.totalorder %s306, %s308
    %p315 = scmp.eq.s32.totalorder %s25, 1
    %p316 = por %p314, %p315
    %p317 = scmp.ne.s32.totalorder %s308, %s309
    %p318 = scmp.eq.s32.totalorder %s25, 0
    %p319 = por %p317, %p318
    %p320 = scmp.ne.s32.totalorder %s308, %s309
    %p321 = scmp.eq.s32.totalorder %s26, 1
    %p322 = por %p320, %p321
    %p324 = scmp.ne.s32.totalorder %s309, %s323
    %p325 = scmp.eq.s32.totalorder %s26, 0
    %p326 = por %p324, %p325
    %s327 = ssub.s32 %s20, %s27
    %p328 = scmp.eq.s32.totalorder %s327, 0
    %s330 = sadd.s32 %s329, 1
    %s331 = scalar_select %p328, %s329, %s330
    %p334 = pneg %p328
    %p335 = scmp.eq.s32.totalorder %s20, 1
    %p336 = por %p334, %p335
    %p337 = scmp.ne.s32.totalorder %s329, %s332
    %p338 = scmp.eq.s32.totalorder %s20, 0
    %p339 = por %p337, %p338
    %p340 = scmp.ne.s32.totalorder %s329, %s332
    %p341 = scmp.eq.s32.totalorder %s25, 1
    %p342 = por %p340, %p341
    %p343 = scmp.ne.s32.totalorder %s332, %s333
    %p344 = scmp.eq.s32.totalorder %s25, 0
    %p345 = por %p343, %p344
    %p346 = scmp.ne.s32.totalorder %s332, %s333
    %p347 = scmp.eq.s32.totalorder %s26, 1
    %p348 = por %p346, %p347
    %p350 = scmp.ne.s32.totalorder %s333, %s349
    %p351 = scmp.eq.s32.totalorder %s26, 0
    %p352 = por %p350, %p351
    %p353 = scmp.le.s32.totalorder 1, %s20
    %p354 = scmp.lt.s32.totalorder %s20, 3
    %p355 = pnand %p353, %p354
    %p356 = pneg %p355
    // Predicated region
    $region9: #{autoencoder_forward.1} parent=5 // pred_check
      _
    $region10: #{autoencoder_forward.1} parent=5 // pred_check_branch
      %358 = sbr.rel (%p355) target = $region12
    $region11: #{autoencoder_forward.1} parent=5 // pred_region
      %s359 = ssub.s32 %s20, 1
      // Predicated region
      $region13: #{autoencoder_forward.1} parent=11 // pred_check
        %p360 = pneg %p67
      $region14: #{autoencoder_forward.1} parent=11 // pred_check_branch
        %362 = sbr.rel (%p360) target = $region16
      $region15: #{autoencoder_forward.1} parent=11 // pred_region
        _
      $region16: #{autoencoder_forward.1} parent=11 // pred_fallthru
        _
      // Predicated region
      $region17: #{autoencoder_forward.1} parent=11 // pred_check
        %p363 = pneg %p88
      $region18: #{autoencoder_forward.1} parent=11 // pred_check_branch
        %365 = sbr.rel (%p363) target = $region20
      $region19: #{autoencoder_forward.1} parent=11 // pred_region
        _
      $region20: #{autoencoder_forward.1} parent=11 // pred_fallthru
        _
      // Predicated region
      $region21: #{autoencoder_forward.1} parent=11 // pred_check
        %p366 = pneg %p109
      $region22: #{autoencoder_forward.1} parent=11 // pred_check_branch
        %368 = sbr.rel (%p366) target = $region24
      $region23: #{autoencoder_forward.1} parent=11 // pred_region
        _
      $region24: #{autoencoder_forward.1} parent=11 // pred_fallthru
        _
      // Predicated region
      $region25: #{autoencoder_forward.1} parent=11 // pred_check
        %p369 = pneg %p130
      $region26: #{autoencoder_forward.1} parent=11 // pred_check_branch
        %371 = sbr.rel (%p369) target = $region28
      $region27: #{autoencoder_forward.1} parent=11 // pred_region
        _
      $region28: #{autoencoder_forward.1} parent=11 // pred_fallthru
        _
      // Predicated region
      $region29: #{autoencoder_forward.1} parent=11 // pred_check
        %p372 = pneg %p151
      $region30: #{autoencoder_forward.1} parent=11 // pred_check_branch
        %374 = sbr.rel (%p372) target = $region32
      $region31: #{autoencoder_forward.1} parent=11 // pred_region
        _
      $region32: #{autoencoder_forward.1} parent=11 // pred_fallthru
        _
      // Predicated region
      $region33: #{autoencoder_forward.1} parent=11 // pred_check
        %p375 = pneg %p172
      $region34: #{autoencoder_forward.1} parent=11 // pred_check_branch
        %377 = sbr.rel (%p375) target = $region36
      $region35: #{autoencoder_forward.1} parent=11 // pred_region
        _
      $region36: #{autoencoder_forward.1} parent=11 // pred_fallthru
        _
      // Predicated region
      $region37: #{autoencoder_forward.1} parent=11 // pred_check
        %p378 = pneg %p193
      $region38: #{autoencoder_forward.1} parent=11 // pred_check_branch
        %380 = sbr.rel (%p378) target = $region40
      $region39: #{autoencoder_forward.1} parent=11 // pred_region
        _
      $region40: #{autoencoder_forward.1} parent=11 // pred_fallthru
        _
      // Predicated region
      $region41: #{autoencoder_forward.1} parent=11 // pred_check
        %p381 = pneg %p214
      $region42: #{autoencoder_forward.1} parent=11 // pred_check_branch
        %383 = sbr.rel (%p381) target = $region44
      $region43: #{autoencoder_forward.1} parent=11 // pred_region
        _
      $region44: #{autoencoder_forward.1} parent=11 // pred_fallthru
        _
      // Predicated region
      $region45: #{autoencoder_forward.1} parent=11 // pred_check
        %p384 = pneg %p235
      $region46: #{autoencoder_forward.1} parent=11 // pred_check_branch
        %386 = sbr.rel (%p384) target = $region48
      $region47: #{autoencoder_forward.1} parent=11 // pred_region
        _
      $region48: #{autoencoder_forward.1} parent=11 // pred_fallthru
        _
      // Predicated region
      $region49: #{autoencoder_forward.1} parent=11 // pred_check
        %p387 = pneg %p256
      $region50: #{autoencoder_forward.1} parent=11 // pred_check_branch
        %389 = sbr.rel (%p387) target = $region52
      $region51: #{autoencoder_forward.1} parent=11 // pred_region
        _
      $region52: #{autoencoder_forward.1} parent=11 // pred_fallthru
        _
      // Predicated region
      $region53: #{autoencoder_forward.1} parent=11 // pred_check
        %p390 = pneg %p277
      $region54: #{autoencoder_forward.1} parent=11 // pred_check_branch
        %392 = sbr.rel (%p390) target = $region56
      $region55: #{autoencoder_forward.1} parent=11 // pred_region
        _
      $region56: #{autoencoder_forward.1} parent=11 // pred_fallthru
        _
      // Predicated region
      $region57: #{autoencoder_forward.1} parent=11 // pred_check
        %p393 = pneg %p298
      $region58: #{autoencoder_forward.1} parent=11 // pred_check_branch
        %395 = sbr.rel (%p393) target = $region60
      $region59: #{autoencoder_forward.1} parent=11 // pred_region
        _
      $region60: #{autoencoder_forward.1} parent=11 // pred_fallthru
        _
      // Predicated region
      $region61: #{autoencoder_forward.1} parent=11 // pred_check
        %p396 = pneg %p319
      $region62: #{autoencoder_forward.1} parent=11 // pred_check_branch
        %398 = sbr.rel (%p396) target = $region64
      $region63: #{autoencoder_forward.1} parent=11 // pred_region
        _
      $region64: #{autoencoder_forward.1} parent=11 // pred_fallthru
        _
    $region12: #{autoencoder_forward.1} parent=5 // pred_fallthru
      _
    %p399 = scmp.lt.s32.totalorder %s20, 2
    // Predicated region
    $region65: #{autoencoder_forward.1} parent=5 // pred_check
      %p400 = pneg %p399
    $region66: #{autoencoder_forward.1} parent=5 // pred_check_branch
      %402 = sbr.rel (%p400) target = $region68
    $region67: #{autoencoder_forward.1} parent=5 // pred_region
      // Predicated region
      $region69: #{autoencoder_forward.1} parent=67 // pred_check
        %p403 = pneg %p40
      $region70: #{autoencoder_forward.1} parent=67 // pred_check_branch
        %405 = sbr.rel (%p403) target = $region72
      $region71: #{autoencoder_forward.1} parent=67 // pred_region
        %s406 = smul.u32 2, %s20
        %p407 = scmp.lt.s32.totalorder %s406, 3
        %s408 = scalar_select %p407, %s406, 3
        %s409 = smul.addr %s408, 4
        %s410 = smul.addr %s409, 8
        %s411 = scalar_lea.vmem %s0, %s410
        %s412 = smul.u32 2, %s20
      $region72: #{autoencoder_forward.1} parent=67 // pred_fallthru
        _
    $region68: #{autoencoder_forward.1} parent=5 // pred_fallthru
      _
    %p413 = scmp.le.s32.totalorder 1, %s20
    %p414 = scmp.lt.s32.totalorder %s20, 3
    %p415 = pnand %p413, %p414
    %p416 = pneg %p415
    // Predicated region
    $region73: #{autoencoder_forward.1} parent=5 // pred_check
      _
    $region74: #{autoencoder_forward.1} parent=5 // pred_check_branch
      %418 = sbr.rel (%p415) target = $region76
    $region75: #{autoencoder_forward.1} parent=5 // pred_region
      %s419 = ssub.s32 %s20, 1
      %s420 = smul.u32 2, %s25
      %p421 = scmp.lt.s32.totalorder %s420, 3
      %s422 = scalar_select %p421, %s420, 3
      %s423 = smul.addr %s422, 4
      %s424 = smul.addr %s423, 8
      %s425 = scalar_lea.vmem %s0, %s424
      %p426 = pneg %p46
      %p427 = pneg %p43
      %p428 = pneg %p67
      %p429 = pneg %p64
      %p430 = pneg %p88
      %p431 = pneg %p85
      %p432 = pneg %p109
      %p433 = pneg %p106
      %p434 = pneg %p130
      %p435 = pneg %p127
      %p436 = pneg %p151
      %p437 = pneg %p148
      %p438 = pneg %p172
      %p439 = pneg %p169
      %p440 = pneg %p193
      %p441 = pneg %p190
      %p442 = pneg %p214
      %p443 = pneg %p211
      %p444 = pneg %p235
      %p445 = pneg %p232
      %p446 = pneg %p256
      %p447 = pneg %p253
      %p448 = pneg %p277
      %p449 = pneg %p274
      %p450 = pneg %p298
      %p451 = pneg %p295
      %p452 = pneg %p319
      %p453 = pneg %p316
      %p454 = pneg %p345
      %p455 = pneg %p342
      %s456 = smul.u32 2, %s25
      %p457 = scmp.lt.s32.totalorder %s456, 3
      %s458 = scalar_select %p457, %s456, 3
      %s459 = smul.addr %s458, 8
      %s460 = scalar_lea.vmem %s14, %s459
      %s461 = smul.u32 2, %s25
      %p462 = scmp.lt.s32.totalorder %s461, 3
      %s463 = scalar_select %p462, %s461, 3
      %s464 = smul.addr %s463, 4
      %s465 = smul.addr %s464, 8
      %s466 = scalar_lea.vmem %s0, %s465
      %s467 = smul.u32 2, %s25
      %s468 = smul.u32 2, %s25
      %p469 = scmp.lt.s32.totalorder %s468, 3
      %s470 = scalar_select %p469, %s468, 3
      %s471 = smul.addr %s470, 8
      %s472 = scalar_lea.vmem %s14, %s471
      %s473 = smul.u32 2, %s25
      %v474 = vld [vmem:[%s466] sm:$0xff]
      %v475 = vld [vmem:[%s466 + $0x8] sm:$0xff]
      %v476 = vld [vmem:[%s466 + $0x10] sm:$0xff]
      %v477 = vld [vmem:[%s466 + $0x18] sm:$0xff]
      %v478 = vld [vmem:[%s466 + $0x20] sm:$0xff]
      %v479 = vld [vmem:[%s466 + $0x28] sm:$0xff]
      %v480 = vld [vmem:[%s466 + $0x30] sm:$0xff]
      %v481 = vld [vmem:[%s466 + $0x38] sm:$0xff]
      %vm490 = vcmask 1040384
      %v491 = vrot.slane %v474, 7
      %v492 = vrot.slane %v475, 7
      %v493 = vsel %vm490, %v491, %v492
      %v494 = vrot.slane %v476, 7
      %v495 = vsel %vm490, %v492, %v494
      %v496 = vrot.slane %v477, 7
      %v497 = vsel %vm490, %v494, %v496
      %v498 = vrot.slane %v478, 7
      %v499 = vrot.slane %v479, 7
      %v500 = vsel %vm490, %v498, %v499
      %v501 = vrot.slane %v480, 7
      %v502 = vsel %vm490, %v499, %v501
      %v503 = vrot.slane %v481, 7
      %v504 = vsel %vm490, %v501, %v503
      %v513 = vsel %vm490, 0.0, %v491
      %v514 = vsel %vm490, 0.0, %v498
      %vm515 = vcmask 1046528
      %v516 = vrot.slane %v474, 1
      %v517 = vrot.slane %v475, 1
      %v518 = vsel %vm515, %v516, %v517
      %v519 = vrot.slane %v476, 1
      %v520 = vsel %vm515, %v517, %v519
      %v521 = vrot.slane %v477, 1
      %v522 = vsel %vm515, %v519, %v521
      %v523 = vrot.slane %v478, 1
      %v524 = vrot.slane %v479, 1
      %v525 = vsel %vm515, %v523, %v524
      %v526 = vrot.slane %v480, 1
      %v527 = vsel %vm515, %v524, %v526
      %v528 = vrot.slane %v481, 1
      %v529 = vsel %vm515, %v526, %v528
      %v532 = vsel %vm515, %v521, 0.0
      %v533 = vsel %vm515, %v528, 0.0
      %534 = vrot.lane.b32.xlu0 %v474, 64
      %v535 = vpop.permute.xlu0 %534
      %536 = vrot.lane.b32.xlu0 %v475, 64
      %v537 = vpop.permute.xlu0 %536
      %538 = vrot.lane.b32.xlu0 %v476, 64
      %v539 = vpop.permute.xlu0 %538
      %540 = vrot.lane.b32.xlu0 %v477, 64
      %v541 = vpop.permute.xlu0 %540
      %542 = vrot.lane.b32.xlu0 %v478, 64
      %v543 = vpop.permute.xlu0 %542
      %544 = vrot.lane.b32.xlu0 %v479, 64
      %v545 = vpop.permute.xlu0 %544
      %546 = vrot.lane.b32.xlu0 %v480, 64
      %v547 = vpop.permute.xlu0 %546
      %548 = vrot.lane.b32.xlu0 %v481, 64
      %v549 = vpop.permute.xlu0 %548
      %vm558 = vcmask 523264
      %v559 = vsel %vm558, %v513, %v535
      %v560 = vsel %vm558, %v493, %v537
      %v561 = vsel %vm558, %v495, %v539
      %v562 = vsel %vm558, %v497, %v541
      %v563 = vsel %vm558, %v514, %v543
      %v564 = vsel %vm558, %v500, %v545
      %v565 = vsel %vm558, %v502, %v547
      %v566 = vsel %vm558, %v504, %v549
      %v567 = vld [vmem:[%s1] sm:$0xff]
      %v568 = vld [vmem:[%s1 + $0x8] sm:$0xff]
      %v569 = vld [vmem:[%s1 + $0x10] sm:$0xff]
      %v570 = vld [vmem:[%s1 + $0x18] sm:$0xff]
      %v571 = vld [vmem:[%s1 + $0x20] sm:$0xff]
      %v572 = vld [vmem:[%s1 + $0x28] sm:$0xff]
      %v573 = vld [vmem:[%s1 + $0x30] sm:$0xff]
      %v574 = vld [vmem:[%s1 + $0x38] sm:$0xff]
      %v575 = vld [vmem:[%s1 + $0x40] sm:$0xff]
      %v576 = vld [vmem:[%s1 + $0x48] sm:$0xff]
      %v577 = vld [vmem:[%s1 + $0x50] sm:$0xff]
      %v578 = vld [vmem:[%s1 + $0x58] sm:$0xff]
      %v579 = vld [vmem:[%s1 + $0x60] sm:$0xff]
      %v580 = vld [vmem:[%s1 + $0x68] sm:$0xff]
      %v581 = vld [vmem:[%s1 + $0x70] sm:$0xff]
      %v582 = vld [vmem:[%s1 + $0x78] sm:$0xff]
      %v583 = vld [vmem:[%s1 + $0x80] sm:$0xff]
      %v584 = vld [vmem:[%s1 + $0x88] sm:$0xff]
      %v585 = vld [vmem:[%s1 + $0x90] sm:$0xff]
      %v586 = vld [vmem:[%s1 + $0x98] sm:$0xff]
      %v587 = vld [vmem:[%s1 + $0xa0] sm:$0xff]
      %v588 = vld [vmem:[%s1 + $0xa8] sm:$0xff]
      %v589 = vld [vmem:[%s1 + $0xb0] sm:$0xff]
      %v590 = vld [vmem:[%s1 + $0xb8] sm:$0xff]
      %v591 = vld [vmem:[%s2] sm:$0x1]
      %v593 = vlaneseq
      %v594 = vshrl.u32 %v593, 7
      %v595 = vsub.s32 0, %v594
      %v596 = vrot.slane %v591, %v595
      %v598 = vsel %vm558, %v518, 0
      %v600 = vsel %vm558, %v520, 0
      %v602 = vsel %vm558, %v522, 0
      %v605 = vsel %vm558, %v532, 0
      %v607 = vsel %vm558, %v525, 0
      %v609 = vsel %vm558, %v527, 0
      %v611 = vsel %vm558, %v529, 0
      %v614 = vsel %vm558, %v533, 0
      %616 = vmatprep.subr.mxu0 0.0
      %617 = vmatpush1.msra.mxu0 %v582
      %618 = vmatprep.subr.mxu0 0.0
      %619 = vmatpush1.msra.mxu0 %v581
      %620 = vmatprep.subr.mxu0 0.0
      %621 = vmatpush1.msra.mxu0 %v580
      %622 = vmatprep.subr.mxu0 0.0
      %623 = vmatpush1.msra.mxu0 %v579
      %624 = vmatprep.subr.mxu0 0.0
      %625 = vmatpush1.msra.mxu0 %v578
      %626 = vmatprep.subr.mxu0 0.0
      %627 = vmatpush1.msra.mxu0 %v577
      %628 = vmatprep.subr.mxu0 0.0
      %629 = vmatpush1.msra.mxu0 %v576
      %630 = vmatprep.subr.mxu0 0.0
      %631 = vmatpush1.msra.mxu0 %v575
      %632 = vmatprep.subr.mxu0 0.0
      %633 = vmatpush1.msra.mxu0 %v574
      %634 = vmatprep.subr.mxu0 0.0
      %635 = vmatpush1.msra.mxu0 %v573
      %636 = vmatprep.subr.mxu0 0.0
      %637 = vmatpush1.msra.mxu0 %v572
      %638 = vmatprep.subr.mxu0 0.0
      %639 = vmatpush1.msra.mxu0 %v571
      %640 = vmatprep.subr.mxu0 0.0
      %641 = vmatpush1.msra.mxu0 %v570
      %642 = vmatprep.subr.mxu0 0.0
      %643 = vmatpush1.msra.mxu0 %v569
      %644 = vmatprep.subr.mxu0 0.0
      %645 = vmatpush1.msra.mxu0 %v568
      %646 = vmatprep.subr.mxu0 0.0
      %647 = vmatpush1.msra.mxu0 %v567
      %648 = vmatprep.subr.mxu0 0.0
      %649 = vmatpush2.msra.mxu0 0.0
      %650 = vmatprep.subr.mxu0 0.0
      %651 = vmatpush2.msra.mxu0 0.0
      %652 = vmatprep.subr.mxu0 0.0
      %653 = vmatpush2.msra.mxu0 0.0
      %654 = vmatprep.subr.mxu0 0.0
      %655 = vmatpush2.msra.mxu0 0.0
      %656 = vmatprep.subr.mxu0 0.0
      %657 = vmatpush2.msra.mxu0 0.0
      %658 = vmatprep.subr.mxu0 0.0
      %659 = vmatpush2.msra.mxu0 0.0
      %660 = vmatprep.subr.mxu0 0.0
      %661 = vmatpush2.msra.mxu0 0.0
      %662 = vmatprep.subr.mxu0 0.0
      %663 = vmatpush2.msra.mxu0 0.0
      %664 = vmatprep.subr.mxu0 0.0
      %665 = vmatpush2.msra.mxu0 %v590
      %666 = vmatprep.subr.mxu0 0.0
      %667 = vmatpush2.msra.mxu0 %v589
      %668 = vmatprep.subr.mxu0 0.0
      %669 = vmatpush2.msra.mxu0 %v588
      %670 = vmatprep.subr.mxu0 0.0
      %671 = vmatpush2.msra.mxu0 %v587
      %672 = vmatprep.subr.mxu0 0.0
      %673 = vmatpush2.msra.mxu0 %v586
      %674 = vmatprep.subr.mxu0 0.0
      %675 = vmatpush2.msra.mxu0 %v585
      %676 = vmatprep.subr.mxu0 0.0
      %677 = vmatpush2.msra.mxu0 %v584
      %678 = vmatprep.subr.mxu0 0.0
      %679 = vmatpush2.msra.mxu0 %v583
      %680 = vmatprep.mubr.f32.mxu0 %v598
      %681 = vmatmul.mubr.f32.gmra.mxu0 %v559
      %v682 = vpop.f32.mrf.mxu0
      %v683 = vadd.f32 %v596, %v682
      %v684 = vpop.f32.mrf.mxu0
      %685 = vmatprep.mubr.f32.mxu0 %v600
      %686 = vmatmul.mubr.f32.gmra.mxu0 %v560
      %v687 = vpop.f32.mrf.mxu0
      %v688 = vadd.f32 %v596, %v687
      %v689 = vpop.f32.mrf.mxu0
      %690 = vmatprep.mubr.f32.mxu0 %v602
      %691 = vmatmul.mubr.f32.gmra.mxu0 %v561
      %v692 = vpop.f32.mrf.mxu0
      %v693 = vadd.f32 %v596, %v692
      %v694 = vpop.f32.mrf.mxu0
      %695 = vmatprep.mubr.f32.mxu0 %v605
      %696 = vmatmul.mubr.f32.gmra.mxu0 %v562
      %v697 = vpop.f32.mrf.mxu0
      %v698 = vadd.f32 %v596, %v697
      %v699 = vpop.f32.mrf.mxu0
      %700 = vmatprep.mubr.f32.mxu0 %v607
      %701 = vmatmul.mubr.f32.gmra.mxu0 %v563
      %v702 = vpop.f32.mrf.mxu0
      %v703 = vadd.f32 %v596, %v702
      %v704 = vpop.f32.mrf.mxu0
      %705 = vmatprep.mubr.f32.mxu0 %v609
      %706 = vmatmul.mubr.f32.gmra.mxu0 %v564
      %v707 = vpop.f32.mrf.mxu0
      %v708 = vadd.f32 %v596, %v707
      %v709 = vpop.f32.mrf.mxu0
      %710 = vmatprep.mubr.f32.mxu0 %v611
      %711 = vmatmul.mubr.f32.gmra.mxu0 %v565
      %v712 = vpop.f32.mrf.mxu0
      %v713 = vadd.f32 %v596, %v712
      %v714 = vpop.f32.mrf.mxu0
      %715 = vmatprep.mubr.f32.mxu0 %v614
      %716 = vmatmul.mubr.f32.gmra.mxu0 %v566
      %v717 = vpop.f32.mrf.mxu0
      %v718 = vadd.f32 %v596, %v717
      %v719 = vpop.f32.mrf.mxu0
      %720 = vdwg.mxu0
      %v721 = vmax.f32 %v683, 0.0
      %v722 = vmax.f32 %v688, 0.0
      %v723 = vmax.f32 %v693, 0.0
      %v724 = vmax.f32 %v698, 0.0
      %v725 = vmax.f32 %v703, 0.0
      %v726 = vmax.f32 %v708, 0.0
      %v727 = vmax.f32 %v713, 0.0
      %v728 = vmax.f32 %v718, 0.0
      %v737 = vcombine.high %v721, %v721
      %v739 = vunpack.c.l.s4 1983009808
      %v740 = vunpack.c.0.s8 %v739
      %v741 = vlaneseq
      %v742 = vshrl.u32 %v741, 7
      %v743 = vsub.s32 %v740, %v742
      %v744 = vrot.slane %v721, %v743
      %v746 = vunpack.c.l.s4 1983009808
      %v747 = vunpack.c.0.s8 %v746
      %v748 = vlaneseq
      %v749 = vshrl.u32 %v748, 7
      %v750 = vsub.s32 %v747, %v749
      %v751 = vrot.slane %v737, %v750
      %v752 = vcombine.high %v744, %v744
      %v753 = vcombine.high %v751, %v751
      %v754 = vcombine.high %v722, %v722
      %v756 = vunpack.c.l.s4 1983009808
      %v757 = vunpack.c.0.s8 %v756
      %v758 = vlaneseq
      %v759 = vshrl.u32 %v758, 7
      %v760 = vsub.s32 %v757, %v759
      %v761 = vrot.slane %v722, %v760
      %v763 = vunpack.c.l.s4 1983009808
      %v764 = vunpack.c.0.s8 %v763
      %v765 = vlaneseq
      %v766 = vshrl.u32 %v765, 7
      %v767 = vsub.s32 %v764, %v766
      %v768 = vrot.slane %v754, %v767
      %v769 = vcombine.high %v761, %v761
      %v770 = vcombine.high %v768, %v768
      %v771 = vcombine.high %v723, %v723
      %v773 = vunpack.c.l.s4 1983009808
      %v774 = vunpack.c.0.s8 %v773
      %v775 = vlaneseq
      %v776 = vshrl.u32 %v775, 7
      %v777 = vsub.s32 %v774, %v776
      %v778 = vrot.slane %v723, %v777
      %v780 = vunpack.c.l.s4 1983009808
      %v781 = vunpack.c.0.s8 %v780
      %v782 = vlaneseq
      %v783 = vshrl.u32 %v782, 7
      %v784 = vsub.s32 %v781, %v783
      %v785 = vrot.slane %v771, %v784
      %v786 = vcombine.high %v778, %v778
      %v787 = vcombine.high %v785, %v785
      %v788 = vcombine.high %v724, %v724
      %v790 = vunpack.c.l.s4 1983009808
      %v791 = vunpack.c.0.s8 %v790
      %v792 = vlaneseq
      %v793 = vshrl.u32 %v792, 7
      %v794 = vsub.s32 %v791, %v793
      %v795 = vrot.slane %v724, %v794
      %v797 = vunpack.c.l.s4 1983009808
      %v798 = vunpack.c.0.s8 %v797
      %v799 = vlaneseq
      %v800 = vshrl.u32 %v799, 7
      %v801 = vsub.s32 %v798, %v800
      %v802 = vrot.slane %v788, %v801
      %v803 = vcombine.high %v795, %v795
      %v804 = vcombine.high %v802, %v802
      %v805 = vcombine.high %v725, %v725
      %v807 = vunpack.c.l.s4 1983009808
      %v808 = vunpack.c.0.s8 %v807
      %v809 = vlaneseq
      %v810 = vshrl.u32 %v809, 7
      %v811 = vsub.s32 %v808, %v810
      %v812 = vrot.slane %v725, %v811
      %v814 = vunpack.c.l.s4 1983009808
      %v815 = vunpack.c.0.s8 %v814
      %v816 = vlaneseq
      %v817 = vshrl.u32 %v816, 7
      %v818 = vsub.s32 %v815, %v817
      %v819 = vrot.slane %v805, %v818
      %v820 = vcombine.high %v812, %v812
      %v821 = vcombine.high %v819, %v819
      %v822 = vcombine.high %v726, %v726
      %v824 = vunpack.c.l.s4 1983009808
      %v825 = vunpack.c.0.s8 %v824
      %v826 = vlaneseq
      %v827 = vshrl.u32 %v826, 7
      %v828 = vsub.s32 %v825, %v827
      %v829 = vrot.slane %v726, %v828
      %v831 = vunpack.c.l.s4 1983009808
      %v832 = vunpack.c.0.s8 %v831
      %v833 = vlaneseq
      %v834 = vshrl.u32 %v833, 7
      %v835 = vsub.s32 %v832, %v834
      %v836 = vrot.slane %v822, %v835
      %v837 = vcombine.high %v829, %v829
      %v838 = vcombine.high %v836, %v836
      %v839 = vcombine.high %v727, %v727
      %v841 = vunpack.c.l.s4 1983009808
      %v842 = vunpack.c.0.s8 %v841
      %v843 = vlaneseq
      %v844 = vshrl.u32 %v843, 7
      %v845 = vsub.s32 %v842, %v844
      %v846 = vrot.slane %v727, %v845
      %v848 = vunpack.c.l.s4 1983009808
      %v849 = vunpack.c.0.s8 %v848
      %v850 = vlaneseq
      %v851 = vshrl.u32 %v850, 7
      %v852 = vsub.s32 %v849, %v851
      %v853 = vrot.slane %v839, %v852
      %v854 = vcombine.high %v846, %v846
      %v855 = vcombine.high %v853, %v853
      %v856 = vcombine.high %v728, %v728
      %v858 = vunpack.c.l.s4 1983009808
      %v859 = vunpack.c.0.s8 %v858
      %v860 = vlaneseq
      %v861 = vshrl.u32 %v860, 7
      %v862 = vsub.s32 %v859, %v861
      %v863 = vrot.slane %v728, %v862
      %v865 = vunpack.c.l.s4 1983009808
      %v866 = vunpack.c.0.s8 %v865
      %v867 = vlaneseq
      %v868 = vshrl.u32 %v867, 7
      %v869 = vsub.s32 %v866, %v868
      %v870 = vrot.slane %v856, %v869
      %v871 = vcombine.high %v863, %v863
      %v872 = vcombine.high %v870, %v870
      %v905 = vrot.slane %v744, 7
      %v906 = vrot.slane %v905, 2
      %v907 = vrot.slane %v752, 7
      %v908 = vrot.slane %v907, 2
      %v909 = vrot.slane %v751, 7
      %v910 = vrot.slane %v909, 2
      %v911 = vrot.slane %v753, 7
      %v912 = vrot.slane %v911, 2
      %v913 = vrot.slane %v761, 7
      %v914 = vrot.slane %v913, 2
      %v915 = vrot.slane %v769, 7
      %v916 = vrot.slane %v915, 2
      %v917 = vrot.slane %v768, 7
      %v918 = vrot.slane %v917, 2
      %v919 = vrot.slane %v770, 7
      %v920 = vrot.slane %v919, 2
      %v921 = vrot.slane %v778, 7
      %v922 = vrot.slane %v921, 2
      %v923 = vrot.slane %v786, 7
      %v924 = vrot.slane %v923, 2
      %v925 = vrot.slane %v785, 7
      %v926 = vrot.slane %v925, 2
      %v927 = vrot.slane %v787, 7
      %v928 = vrot.slane %v927, 2
      %v929 = vrot.slane %v795, 7
      %v930 = vrot.slane %v929, 2
      %v931 = vrot.slane %v803, 7
      %v932 = vrot.slane %v931, 2
      %v933 = vrot.slane %v802, 7
      %v934 = vrot.slane %v933, 2
      %v935 = vrot.slane %v804, 7
      %v936 = vrot.slane %v935, 2
      %v937 = vrot.slane %v812, 7
      %v938 = vrot.slane %v937, 2
      %v939 = vrot.slane %v820, 7
      %v940 = vrot.slane %v939, 2
      %v941 = vrot.slane %v819, 7
      %v942 = vrot.slane %v941, 2
      %v943 = vrot.slane %v821, 7
      %v944 = vrot.slane %v943, 2
      %v945 = vrot.slane %v829, 7
      %v946 = vrot.slane %v945, 2
      %v947 = vrot.slane %v837, 7
      %v948 = vrot.slane %v947, 2
      %v949 = vrot.slane %v836, 7
      %v950 = vrot.slane %v949, 2
      %v951 = vrot.slane %v838, 7
      %v952 = vrot.slane %v951, 2
      %v953 = vrot.slane %v846, 7
      %v954 = vrot.slane %v953, 2
      %v955 = vrot.slane %v854, 7
      %v956 = vrot.slane %v955, 2
      %v957 = vrot.slane %v853, 7
      %v958 = vrot.slane %v957, 2
      %v959 = vrot.slane %v855, 7
      %v960 = vrot.slane %v959, 2
      %v961 = vrot.slane %v863, 7
      %v962 = vrot.slane %v961, 2
      %v963 = vrot.slane %v871, 7
      %v964 = vrot.slane %v963, 2
      %v965 = vrot.slane %v870, 7
      %v966 = vrot.slane %v965, 2
      %v967 = vrot.slane %v872, 7
      %v968 = vrot.slane %v967, 2
      %v1001 = vmax.f32 %v744, %v906
      %v1002 = vmax.f32 %v752, %v908
      %v1003 = vmax.f32 %v751, %v910
      %v1004 = vmax.f32 %v753, %v912
      %v1005 = vmax.f32 %v761, %v914
      %v1006 = vmax.f32 %v769, %v916
      %v1007 = vmax.f32 %v768, %v918
      %v1008 = vmax.f32 %v770, %v920
      %v1009 = vmax.f32 %v778, %v922
      %v1010 = vmax.f32 %v786, %v924
      %v1011 = vmax.f32 %v785, %v926
      %v1012 = vmax.f32 %v787, %v928
      %v1013 = vmax.f32 %v795, %v930
      %v1014 = vmax.f32 %v803, %v932
      %v1015 = vmax.f32 %v802, %v934
      %v1016 = vmax.f32 %v804, %v936
      %v1017 = vmax.f32 %v812, %v938
      %v1018 = vmax.f32 %v820, %v940
      %v1019 = vmax.f32 %v819, %v942
      %v1020 = vmax.f32 %v821, %v944
      %v1021 = vmax.f32 %v829, %v946
      %v1022 = vmax.f32 %v837, %v948
      %v1023 = vmax.f32 %v836, %v950
      %v1024 = vmax.f32 %v838, %v952
      %v1025 = vmax.f32 %v846, %v954
      %v1026 = vmax.f32 %v854, %v956
      %v1027 = vmax.f32 %v853, %v958
      %v1028 = vmax.f32 %v855, %v960
      %v1029 = vmax.f32 %v863, %v962
      %v1030 = vmax.f32 %v871, %v964
      %v1031 = vmax.f32 %v870, %v966
      %v1032 = vmax.f32 %v872, %v968
      %v1063 = vlaneseq
      %v1064 = vshrl.u32 %v1063, 7
      %v1065 = vsub.s32 0, %v1064
      %v1066 = vrot.slane %v1001, %v1065
      %v1067 = vlaneseq
      %v1068 = vshrl.u32 %v1067, 7
      %v1069 = vsub.s32 0, %v1068
      %v1070 = vrot.slane %v1002, %v1069
      %v1071 = vlaneseq
      %v1072 = vshrl.u32 %v1071, 7
      %v1073 = vsub.s32 0, %v1072
      %v1074 = vrot.slane %v1003, %v1073
      %v1075 = vlaneseq
      %v1076 = vshrl.u32 %v1075, 7
      %v1077 = vsub.s32 0, %v1076
      %v1078 = vrot.slane %v1004, %v1077
      %v1079 = vlaneseq
      %v1080 = vshrl.u32 %v1079, 7
      %v1081 = vsub.s32 0, %v1080
      %v1082 = vrot.slane %v1005, %v1081
      %v1083 = vlaneseq
      %v1084 = vshrl.u32 %v1083, 7
      %v1085 = vsub.s32 0, %v1084
      %v1086 = vrot.slane %v1006, %v1085
      %v1087 = vlaneseq
      %v1088 = vshrl.u32 %v1087, 7
      %v1089 = vsub.s32 0, %v1088
      %v1090 = vrot.slane %v1007, %v1089
      %v1091 = vlaneseq
      %v1092 = vshrl.u32 %v1091, 7
      %v1093 = vsub.s32 0, %v1092
      %v1094 = vrot.slane %v1008, %v1093
      %v1095 = vlaneseq
      %v1096 = vshrl.u32 %v1095, 7
      %v1097 = vsub.s32 0, %v1096
      %v1098 = vrot.slane %v1009, %v1097
      %v1099 = vlaneseq
      %v1100 = vshrl.u32 %v1099, 7
      %v1101 = vsub.s32 0, %v1100
      %v1102 = vrot.slane %v1010, %v1101
      %v1103 = vlaneseq
      %v1104 = vshrl.u32 %v1103, 7
      %v1105 = vsub.s32 0, %v1104
      %v1106 = vrot.slane %v1011, %v1105
      %v1107 = vlaneseq
      %v1108 = vshrl.u32 %v1107, 7
      %v1109 = vsub.s32 0, %v1108
      %v1110 = vrot.slane %v1012, %v1109
      %v1111 = vlaneseq
      %v1112 = vshrl.u32 %v1111, 7
      %v1113 = vsub.s32 0, %v1112
      %v1114 = vrot.slane %v1013, %v1113
      %v1115 = vlaneseq
      %v1116 = vshrl.u32 %v1115, 7
      %v1117 = vsub.s32 0, %v1116
      %v1118 = vrot.slane %v1014, %v1117
      %v1119 = vlaneseq
      %v1120 = vshrl.u32 %v1119, 7
      %v1121 = vsub.s32 0, %v1120
      %v1122 = vrot.slane %v1015, %v1121
      %v1123 = vlaneseq
      %v1124 = vshrl.u32 %v1123, 7
      %v1125 = vsub.s32 0, %v1124
      %v1126 = vrot.slane %v1017, %v1125
      %v1127 = vlaneseq
      %v1128 = vshrl.u32 %v1127, 7
      %v1129 = vsub.s32 0, %v1128
      %v1130 = vrot.slane %v1018, %v1129
      %v1131 = vlaneseq
      %v1132 = vshrl.u32 %v1131, 7
      %v1133 = vsub.s32 0, %v1132
      %v1134 = vrot.slane %v1019, %v1133
      %v1135 = vlaneseq
      %v1136 = vshrl.u32 %v1135, 7
      %v1137 = vsub.s32 0, %v1136
      %v1138 = vrot.slane %v1020, %v1137
      %v1139 = vlaneseq
      %v1140 = vshrl.u32 %v1139, 7
      %v1141 = vsub.s32 0, %v1140
      %v1142 = vrot.slane %v1021, %v1141
      %v1143 = vlaneseq
      %v1144 = vshrl.u32 %v1143, 7
      %v1145 = vsub.s32 0, %v1144
      %v1146 = vrot.slane %v1022, %v1145
      %v1147 = vlaneseq
      %v1148 = vshrl.u32 %v1147, 7
      %v1149 = vsub.s32 0, %v1148
      %v1150 = vrot.slane %v1023, %v1149
      %v1151 = vlaneseq
      %v1152 = vshrl.u32 %v1151, 7
      %v1153 = vsub.s32 0, %v1152
      %v1154 = vrot.slane %v1024, %v1153
      %v1155 = vlaneseq
      %v1156 = vshrl.u32 %v1155, 7
      %v1157 = vsub.s32 0, %v1156
      %v1158 = vrot.slane %v1025, %v1157
      %v1159 = vlaneseq
      %v1160 = vshrl.u32 %v1159, 7
      %v1161 = vsub.s32 0, %v1160
      %v1162 = vrot.slane %v1026, %v1161
      %v1163 = vlaneseq
      %v1164 = vshrl.u32 %v1163, 7
      %v1165 = vsub.s32 0, %v1164
      %v1166 = vrot.slane %v1027, %v1165
      %v1167 = vlaneseq
      %v1168 = vshrl.u32 %v1167, 7
      %v1169 = vsub.s32 0, %v1168
      %v1170 = vrot.slane %v1028, %v1169
      %v1171 = vlaneseq
      %v1172 = vshrl.u32 %v1171, 7
      %v1173 = vsub.s32 0, %v1172
      %v1174 = vrot.slane %v1029, %v1173
      %v1175 = vlaneseq
      %v1176 = vshrl.u32 %v1175, 7
      %v1177 = vsub.s32 0, %v1176
      %v1178 = vrot.slane %v1030, %v1177
      %v1179 = vlaneseq
      %v1180 = vshrl.u32 %v1179, 7
      %v1181 = vsub.s32 0, %v1180
      %v1182 = vrot.slane %v1031, %v1181
      %vm1183 = vcmask 1042434
      %v1184 = vsel %vm1183, %v1070, %v1066
      %vm1185 = vcmask 1043459
      %v1186 = vsel %vm1185, %v1074, %v1184
      %vm1187 = vcmask 1044484
      %v1188 = vsel %vm1187, %v1078, %v1186
      %vm1189 = vcmask 1045509
      %v1190 = vsel %vm1189, %v1082, %v1188
      %vm1191 = vcmask 1046534
      %v1192 = vsel %vm1191, %v1086, %v1190
      %vm1193 = vcmask 1047559
      %v1194 = vsel %vm1193, %v1090, %v1192
      %vm1195 = vcmask 1041409
      %v1196 = vsel %vm1195, %v1098, %v1094
      %v1197 = vsel %vm1183, %v1102, %v1196
      %v1198 = vsel %vm1185, %v1106, %v1197
      %v1199 = vsel %vm1187, %v1110, %v1198
      %v1200 = vsel %vm1189, %v1114, %v1199
      %v1201 = vsel %vm1191, %v1118, %v1200
      %v1202 = vsel %vm1193, %v1122, %v1201
      %v1203 = vsel %vm1183, %v1130, %v1126
      %v1204 = vsel %vm1185, %v1134, %v1203
      %v1205 = vsel %vm1187, %v1138, %v1204
      %v1206 = vsel %vm1189, %v1142, %v1205
      %v1207 = vsel %vm1191, %v1146, %v1206
      %v1208 = vsel %vm1193, %v1150, %v1207
      %v1209 = vsel %vm1195, %v1158, %v1154
      %v1210 = vsel %vm1183, %v1162, %v1209
      %v1211 = vsel %vm1185, %v1166, %v1210
      %v1212 = vsel %vm1187, %v1170, %v1211
      %v1213 = vsel %vm1189, %v1174, %v1212
      %v1214 = vsel %vm1191, %v1178, %v1213
      %v1215 = vsel %vm1193, %v1182, %v1214
      %v1220 = vsel %vm490, 0.0, %v1194
      %v1221 = vsel %vm490, 0.0, %v1208
      %v1224 = vlaneseq
      %v1225 = vshrl.u32 %v1224, 7
      %v1226 = vsub.s32 0, %v1225
      %v1227 = vrot.slane %v1016, %v1226
      %v1228 = vlaneseq
      %v1229 = vshrl.u32 %v1228, 7
      %v1230 = vsub.s32 0, %v1229
      %v1231 = vrot.slane %v1032, %v1230
      %v1232 = vsel %vm1195, %v1074, %v1070
      %v1233 = vsel %vm1183, %v1078, %v1232
      %v1234 = vsel %vm1185, %v1082, %v1233
      %v1235 = vsel %vm1187, %v1086, %v1234
      %v1236 = vsel %vm1189, %v1090, %v1235
      %v1237 = vsel %vm1191, %v1094, %v1236
      %v1238 = vsel %vm1193, %v1098, %v1237
      %v1239 = vsel %vm1195, %v1106, %v1102
      %v1240 = vsel %vm1183, %v1110, %v1239
      %v1241 = vsel %vm1185, %v1114, %v1240
      %v1242 = vsel %vm1187, %v1118, %v1241
      %v1243 = vsel %vm1189, %v1122, %v1242
      %v1244 = vsel %vm1191, %v1227, %v1243
      %v1245 = vsel %vm1195, %v1134, %v1130
      %v1246 = vsel %vm1183, %v1138, %v1245
      %v1247 = vsel %vm1185, %v1142, %v1246
      %v1248 = vsel %vm1187, %v1146, %v1247
      %v1249 = vsel %vm1189, %v1150, %v1248
      %v1250 = vsel %vm1191, %v1154, %v1249
      %v1251 = vsel %vm1193, %v1158, %v1250
      %v1252 = vsel %vm1195, %v1166, %v1162
      %v1253 = vsel %vm1183, %v1170, %v1252
      %v1254 = vsel %vm1185, %v1174, %v1253
      %v1255 = vsel %vm1187, %v1178, %v1254
      %v1256 = vsel %vm1189, %v1182, %v1255
      %v1257 = vsel %vm1191, %v1231, %v1256
      %v1260 = vsel %vm515, %v1244, 0.0
      %v1261 = vsel %vm515, %v1257, 0.0
      %v1262 = vsel %vm1195, %v1070, %v1066
      %v1263 = vsel %vm1183, %v1074, %v1262
      %v1264 = vsel %vm1185, %v1078, %v1263
      %v1265 = vsel %vm1187, %v1082, %v1264
      %v1266 = vsel %vm1189, %v1086, %v1265
      %v1267 = vsel %vm1191, %v1090, %v1266
      %v1268 = vsel %vm1193, %v1094, %v1267
      %v1269 = vsel %vm1195, %v1102, %v1098
      %v1270 = vsel %vm1183, %v1106, %v1269
      %v1271 = vsel %vm1185, %v1110, %v1270
      %v1272 = vsel %vm1187, %v1114, %v1271
      %v1273 = vsel %vm1189, %v1118, %v1272
      %v1274 = vsel %vm1191, %v1122, %v1273
      %v1275 = vsel %vm1193, %v1227, %v1274
      %v1276 = vsel %vm1195, %v1130, %v1126
      %v1277 = vsel %vm1183, %v1134, %v1276
      %v1278 = vsel %vm1185, %v1138, %v1277
      %v1279 = vsel %vm1187, %v1142, %v1278
      %v1280 = vsel %vm1189, %v1146, %v1279
      %v1281 = vsel %vm1191, %v1150, %v1280
      %v1282 = vsel %vm1193, %v1154, %v1281
      %v1283 = vsel %vm1195, %v1162, %v1158
      %v1284 = vsel %vm1183, %v1166, %v1283
      %v1285 = vsel %vm1185, %v1170, %v1284
      %v1286 = vsel %vm1187, %v1174, %v1285
      %v1287 = vsel %vm1189, %v1178, %v1286
      %v1288 = vsel %vm1191, %v1182, %v1287
      %v1289 = vsel %vm1193, %v1231, %v1288
      %1290 = vrot.lane.b32.xlu0 %v1268, 32
      %v1291 = vpop.permute.xlu0 %1290
      %1292 = vrot.lane.b32.xlu0 %v1275, 32
      %v1293 = vpop.permute.xlu0 %1292
      %1294 = vrot.lane.b32.xlu0 %v1282, 32
      %v1295 = vpop.permute.xlu0 %1294
      %1296 = vrot.lane.b32.xlu0 %v1289, 32
      %v1297 = vpop.permute.xlu0 %1296
      %1304 = vrot.lane.b32.xlu0 %v1238, 64
      %v1305 = vpop.permute.xlu0 %1304
      %1306 = vrot.lane.b32.xlu0 %v1260, 64
      %v1307 = vpop.permute.xlu0 %1306
      %1308 = vrot.lane.b32.xlu0 %v1251, 64
      %v1309 = vpop.permute.xlu0 %1308
      %1310 = vrot.lane.b32.xlu0 %v1261, 64
      %v1311 = vpop.permute.xlu0 %1310
      %vm1316 = vcmask 261120
      %v1317 = vsel %vm1316, %v1220, %v1291
      %v1318 = vsel %vm1316, %v1202, %v1293
      %v1319 = vsel %vm1316, %v1221, %v1295
      %v1320 = vsel %vm1316, %v1215, %v1297
      %v1321 = vsel %vm558, %v1317, %v1305
      %v1322 = vsel %vm558, %v1318, %v1307
      %v1323 = vsel %vm558, %v1319, %v1309
      %v1324 = vsel %vm558, %v1320, %v1311
      %v1325 = vld [vmem:[%s3] sm:$0xff]
      %v1326 = vld [vmem:[%s3 + $0x8] sm:$0xff]
      %v1327 = vld [vmem:[%s3 + $0x10] sm:$0xff]
      %v1328 = vld [vmem:[%s3 + $0x18] sm:$0xff]
      %v1329 = vld [vmem:[%s3 + $0x20] sm:$0xff]
      %v1330 = vld [vmem:[%s3 + $0x28] sm:$0xff]
      %v1331 = vld [vmem:[%s3 + $0x30] sm:$0xff]
      %v1332 = vld [vmem:[%s3 + $0x38] sm:$0xff]
      %v1333 = vld [vmem:[%s3 + $0x40] sm:$0xff]
      %v1334 = vld [vmem:[%s3 + $0x48] sm:$0xff]
      %v1335 = vld [vmem:[%s3 + $0x50] sm:$0xff]
      %v1336 = vld [vmem:[%s3 + $0x58] sm:$0xff]
      %v1337 = vld [vmem:[%s4] sm:$0x1]
      %v1339 = vlaneseq
      %v1340 = vshrl.u32 %v1339, 7
      %v1341 = vsub.s32 0, %v1340
      %v1342 = vrot.slane %v1337, %v1341
      %vm1344 = vcmask 785408
      %v1346 = vsel %vm1344, %v1321, 0
      %v1349 = vsel %vm1344, %v1322, 0
      %v1352 = vsel %vm1344, %v1323, 0
      %v1355 = vsel %vm1344, %v1324, 0
      %1357 = vmatprep.subr.mxu0 0.0
      %1358 = vmatpush1.msra.mxu0 0.0
      %1359 = vmatprep.subr.mxu0 0.0
      %1360 = vmatpush1.msra.mxu0 0.0
      %1361 = vmatprep.subr.mxu0 0.0
      %1362 = vmatpush1.msra.mxu0 0.0
      %1363 = vmatprep.subr.mxu0 0.0
      %1364 = vmatpush1.msra.mxu0 0.0
      %1365 = vmatprep.subr.mxu0 0.0
      %1366 = vmatpush1.msra.mxu0 %v1336
      %1367 = vmatprep.subr.mxu0 0.0
      %1368 = vmatpush1.msra.mxu0 %v1335
      %1369 = vmatprep.subr.mxu0 0.0
      %1370 = vmatpush1.msra.mxu0 %v1334
      %1371 = vmatprep.subr.mxu0 0.0
      %1372 = vmatpush1.msra.mxu0 %v1333
      %1373 = vmatprep.subr.mxu0 0.0
      %1374 = vmatpush1.msra.mxu0 %v1332
      %1375 = vmatprep.subr.mxu0 0.0
      %1376 = vmatpush1.msra.mxu0 %v1331
      %1377 = vmatprep.subr.mxu0 0.0
      %1378 = vmatpush1.msra.mxu0 %v1330
      %1379 = vmatprep.subr.mxu0 0.0
      %1380 = vmatpush1.msra.mxu0 %v1329
      %1381 = vmatprep.subr.mxu0 0.0
      %1382 = vmatpush1.msra.mxu0 %v1328
      %1383 = vmatprep.subr.mxu0 0.0
      %1384 = vmatpush1.msra.mxu0 %v1327
      %1385 = vmatprep.subr.mxu0 0.0
      %1386 = vmatpush1.msra.mxu0 %v1326
      %1387 = vmatprep.subr.mxu0 0.0
      %1388 = vmatpush1.msra.mxu0 %v1325
      %1389 = vmatprep.subr.mxu0 0.0
      %1390 = vmatpush2.msra.mxu0 0.0
      %1391 = vmatprep.subr.mxu0 0.0
      %1392 = vmatpush2.msra.mxu0 0.0
      %1393 = vmatprep.subr.mxu0 0.0
      %1394 = vmatpush2.msra.mxu0 0.0
      %1395 = vmatprep.subr.mxu0 0.0
      %1396 = vmatpush2.msra.mxu0 0.0
      %1397 = vmatprep.subr.mxu0 0.0
      %1398 = vmatpush2.msra.mxu0 0.0
      %1399 = vmatprep.subr.mxu0 0.0
      %1400 = vmatpush2.msra.mxu0 0.0
      %1401 = vmatprep.subr.mxu0 0.0
      %1402 = vmatpush2.msra.mxu0 0.0
      %1403 = vmatprep.subr.mxu0 0.0
      %1404 = vmatpush2.msra.mxu0 0.0
      %1405 = vmatprep.subr.mxu0 0.0
      %1406 = vmatpush2.msra.mxu0 0.0
      %1407 = vmatprep.subr.mxu0 0.0
      %1408 = vmatpush2.msra.mxu0 0.0
      %1409 = vmatprep.subr.mxu0 0.0
      %1410 = vmatpush2.msra.mxu0 0.0
      %1411 = vmatprep.subr.mxu0 0.0
      %1412 = vmatpush2.msra.mxu0 0.0
      %1413 = vmatprep.subr.mxu0 0.0
      %1414 = vmatpush2.msra.mxu0 0.0
      %1415 = vmatprep.subr.mxu0 0.0
      %1416 = vmatpush2.msra.mxu0 0.0
      %1417 = vmatprep.subr.mxu0 0.0
      %1418 = vmatpush2.msra.mxu0 0.0
      %1419 = vmatprep.subr.mxu0 0.0
      %1420 = vmatpush2.msra.mxu0 0.0
      %1421 = vmatprep.mubr.f32.mxu0 0.0
      %1422 = vmatmul.mubr.f32.gmra.mxu0 %v1346
      %v1423 = vpop.f32.mrf.mxu0
      %v1424 = vadd.f32 %v1342, %v1423
      %v1425 = vpop.f32.mrf.mxu0
      %1426 = vmatprep.mubr.f32.mxu0 0.0
      %1427 = vmatmul.mubr.f32.gmra.mxu0 %v1349
      %v1428 = vpop.f32.mrf.mxu0
      %v1429 = vadd.f32 %v1342, %v1428
      %v1430 = vpop.f32.mrf.mxu0
      %1431 = vmatprep.mubr.f32.mxu0 0.0
      %1432 = vmatmul.mubr.f32.gmra.mxu0 %v1352
      %v1433 = vpop.f32.mrf.mxu0
      %v1434 = vadd.f32 %v1342, %v1433
      %v1435 = vpop.f32.mrf.mxu0
      %1436 = vmatprep.mubr.f32.mxu0 0.0
      %1437 = vmatmul.mubr.f32.gmra.mxu0 %v1355
      %v1438 = vpop.f32.mrf.mxu0
      %v1439 = vadd.f32 %v1342, %v1438
      %v1440 = vpop.f32.mrf.mxu0
      %1441 = vdwg.mxu0
      %v1442 = vmax.f32 %v1424, 0.0
      %v1443 = vmax.f32 %v1429, 0.0
      %v1444 = vmax.f32 %v1434, 0.0
      %v1445 = vmax.f32 %v1439, 0.0
      %v1450 = vcombine.high %v1442, %v1442
      %v1452 = vunpack.c.l.s4 1983009808
      %v1453 = vunpack.c.0.s8 %v1452
      %v1454 = vlaneseq
      %v1455 = vshrl.u32 %v1454, 7
      %v1456 = vsub.s32 %v1453, %v1455
      %v1457 = vrot.slane %v1442, %v1456
      %v1459 = vunpack.c.l.s4 1983009808
      %v1460 = vunpack.c.0.s8 %v1459
      %v1461 = vlaneseq
      %v1462 = vshrl.u32 %v1461, 7
      %v1463 = vsub.s32 %v1460, %v1462
      %v1464 = vrot.slane %v1450, %v1463
      %v1465 = vcombine.high %v1457, %v1457
      %v1466 = vcombine.high %v1464, %v1464
      %v1467 = vcombine.high %v1443, %v1443
      %v1469 = vunpack.c.l.s4 1983009808
      %v1470 = vunpack.c.0.s8 %v1469
      %v1471 = vlaneseq
      %v1472 = vshrl.u32 %v1471, 7
      %v1473 = vsub.s32 %v1470, %v1472
      %v1474 = vrot.slane %v1443, %v1473
      %v1476 = vunpack.c.l.s4 1983009808
      %v1477 = vunpack.c.0.s8 %v1476
      %v1478 = vlaneseq
      %v1479 = vshrl.u32 %v1478, 7
      %v1480 = vsub.s32 %v1477, %v1479
      %v1481 = vrot.slane %v1467, %v1480
      %v1482 = vcombine.high %v1474, %v1474
      %v1483 = vcombine.high %v1481, %v1481
      %v1484 = vcombine.high %v1444, %v1444
      %v1486 = vunpack.c.l.s4 1983009808
      %v1487 = vunpack.c.0.s8 %v1486
      %v1488 = vlaneseq
      %v1489 = vshrl.u32 %v1488, 7
      %v1490 = vsub.s32 %v1487, %v1489
      %v1491 = vrot.slane %v1444, %v1490
      %v1493 = vunpack.c.l.s4 1983009808
      %v1494 = vunpack.c.0.s8 %v1493
      %v1495 = vlaneseq
      %v1496 = vshrl.u32 %v1495, 7
      %v1497 = vsub.s32 %v1494, %v1496
      %v1498 = vrot.slane %v1484, %v1497
      %v1499 = vcombine.high %v1491, %v1491
      %v1500 = vcombine.high %v1498, %v1498
      %v1501 = vcombine.high %v1445, %v1445
      %v1503 = vunpack.c.l.s4 1983009808
      %v1504 = vunpack.c.0.s8 %v1503
      %v1505 = vlaneseq
      %v1506 = vshrl.u32 %v1505, 7
      %v1507 = vsub.s32 %v1504, %v1506
      %v1508 = vrot.slane %v1445, %v1507
      %v1510 = vunpack.c.l.s4 1983009808
      %v1511 = vunpack.c.0.s8 %v1510
      %v1512 = vlaneseq
      %v1513 = vshrl.u32 %v1512, 7
      %v1514 = vsub.s32 %v1511, %v1513
      %v1515 = vrot.slane %v1501, %v1514
      %v1516 = vcombine.high %v1508, %v1508
      %v1517 = vcombine.high %v1515, %v1515
      %v1534 = vrot.slane %v1457, 7
      %v1535 = vrot.slane %v1534, 2
      %v1536 = vrot.slane %v1465, 7
      %v1537 = vrot.slane %v1536, 2
      %v1538 = vrot.slane %v1464, 7
      %v1539 = vrot.slane %v1538, 2
      %v1540 = vrot.slane %v1466, 7
      %v1541 = vrot.slane %v1540, 2
      %v1542 = vrot.slane %v1474, 7
      %v1543 = vrot.slane %v1542, 2
      %v1544 = vrot.slane %v1482, 7
      %v1545 = vrot.slane %v1544, 2
      %v1546 = vrot.slane %v1481, 7
      %v1547 = vrot.slane %v1546, 2
      %v1548 = vrot.slane %v1483, 7
      %v1549 = vrot.slane %v1548, 2
      %v1550 = vrot.slane %v1491, 7
      %v1551 = vrot.slane %v1550, 2
      %v1552 = vrot.slane %v1499, 7
      %v1553 = vrot.slane %v1552, 2
      %v1554 = vrot.slane %v1498, 7
      %v1555 = vrot.slane %v1554, 2
      %v1556 = vrot.slane %v1500, 7
      %v1557 = vrot.slane %v1556, 2
      %v1558 = vrot.slane %v1508, 7
      %v1559 = vrot.slane %v1558, 2
      %v1560 = vrot.slane %v1516, 7
      %v1561 = vrot.slane %v1560, 2
      %v1562 = vrot.slane %v1515, 7
      %v1563 = vrot.slane %v1562, 2
      %v1564 = vrot.slane %v1517, 7
      %v1565 = vrot.slane %v1564, 2
      %v1582 = vmax.f32 %v1457, %v1535
      %v1583 = vmax.f32 %v1465, %v1537
      %v1584 = vmax.f32 %v1464, %v1539
      %v1585 = vmax.f32 %v1466, %v1541
      %v1586 = vmax.f32 %v1474, %v1543
      %v1587 = vmax.f32 %v1482, %v1545
      %v1588 = vmax.f32 %v1481, %v1547
      %v1589 = vmax.f32 %v1483, %v1549
      %v1590 = vmax.f32 %v1491, %v1551
      %v1591 = vmax.f32 %v1499, %v1553
      %v1592 = vmax.f32 %v1498, %v1555
      %v1593 = vmax.f32 %v1500, %v1557
      %v1594 = vmax.f32 %v1508, %v1559
      %v1595 = vmax.f32 %v1516, %v1561
      %v1596 = vmax.f32 %v1515, %v1563
      %v1597 = vmax.f32 %v1517, %v1565
      %v1612 = vlaneseq
      %v1613 = vshrl.u32 %v1612, 7
      %v1614 = vsub.s32 0, %v1613
      %v1615 = vrot.slane %v1582, %v1614
      %v1616 = vlaneseq
      %v1617 = vshrl.u32 %v1616, 7
      %v1618 = vsub.s32 0, %v1617
      %v1619 = vrot.slane %v1583, %v1618
      %v1620 = vlaneseq
      %v1621 = vshrl.u32 %v1620, 7
      %v1622 = vsub.s32 0, %v1621
      %v1623 = vrot.slane %v1584, %v1622
      %v1624 = vlaneseq
      %v1625 = vshrl.u32 %v1624, 7
      %v1626 = vsub.s32 0, %v1625
      %v1627 = vrot.slane %v1585, %v1626
      %v1628 = vlaneseq
      %v1629 = vshrl.u32 %v1628, 7
      %v1630 = vsub.s32 0, %v1629
      %v1631 = vrot.slane %v1586, %v1630
      %v1632 = vlaneseq
      %v1633 = vshrl.u32 %v1632, 7
      %v1634 = vsub.s32 0, %v1633
      %v1635 = vrot.slane %v1587, %v1634
      %v1636 = vlaneseq
      %v1637 = vshrl.u32 %v1636, 7
      %v1638 = vsub.s32 0, %v1637
      %v1639 = vrot.slane %v1588, %v1638
      %v1640 = vlaneseq
      %v1641 = vshrl.u32 %v1640, 7
      %v1642 = vsub.s32 0, %v1641
      %v1643 = vrot.slane %v1590, %v1642
      %v1644 = vlaneseq
      %v1645 = vshrl.u32 %v1644, 7
      %v1646 = vsub.s32 0, %v1645
      %v1647 = vrot.slane %v1591, %v1646
      %v1648 = vlaneseq
      %v1649 = vshrl.u32 %v1648, 7
      %v1650 = vsub.s32 0, %v1649
      %v1651 = vrot.slane %v1592, %v1650
      %v1652 = vlaneseq
      %v1653 = vshrl.u32 %v1652, 7
      %v1654 = vsub.s32 0, %v1653
      %v1655 = vrot.slane %v1593, %v1654
      %v1656 = vlaneseq
      %v1657 = vshrl.u32 %v1656, 7
      %v1658 = vsub.s32 0, %v1657
      %v1659 = vrot.slane %v1594, %v1658
      %v1660 = vlaneseq
      %v1661 = vshrl.u32 %v1660, 7
      %v1662 = vsub.s32 0, %v1661
      %v1663 = vrot.slane %v1595, %v1662
      %v1664 = vlaneseq
      %v1665 = vshrl.u32 %v1664, 7
      %v1666 = vsub.s32 0, %v1665
      %v1667 = vrot.slane %v1596, %v1666
      %v1668 = vsel %vm1183, %v1619, %v1615
      %v1669 = vsel %vm1185, %v1623, %v1668
      %v1670 = vsel %vm1187, %v1627, %v1669
      %v1671 = vsel %vm1189, %v1631, %v1670
      %v1672 = vsel %vm1191, %v1635, %v1671
      %v1673 = vsel %vm1193, %v1639, %v1672
      %v1674 = vsel %vm1183, %v1647, %v1643
      %v1675 = vsel %vm1185, %v1651, %v1674
      %v1676 = vsel %vm1187, %v1655, %v1675
      %v1677 = vsel %vm1189, %v1659, %v1676
      %v1678 = vsel %vm1191, %v1663, %v1677
      %v1679 = vsel %vm1193, %v1667, %v1678
      %v1682 = vsel %vm490, 0.0, %v1673
      %v1683 = vsel %vm490, 0.0, %v1679
      %v1686 = vlaneseq
      %v1687 = vshrl.u32 %v1686, 7
      %v1688 = vsub.s32 0, %v1687
      %v1689 = vrot.slane %v1589, %v1688
      %v1690 = vlaneseq
      %v1691 = vshrl.u32 %v1690, 7
      %v1692 = vsub.s32 0, %v1691
      %v1693 = vrot.slane %v1597, %v1692
      %v1694 = vsel %vm1195, %v1623, %v1619
      %v1695 = vsel %vm1183, %v1627, %v1694
      %v1696 = vsel %vm1185, %v1631, %v1695
      %v1697 = vsel %vm1187, %v1635, %v1696
      %v1698 = vsel %vm1189, %v1639, %v1697
      %v1699 = vsel %vm1191, %v1689, %v1698
      %v1700 = vsel %vm1195, %v1651, %v1647
      %v1701 = vsel %vm1183, %v1655, %v1700
      %v1702 = vsel %vm1185, %v1659, %v1701
      %v1703 = vsel %vm1187, %v1663, %v1702
      %v1704 = vsel %vm1189, %v1667, %v1703
      %v1705 = vsel %vm1191, %v1693, %v1704
      %v1708 = vsel %vm515, %v1699, 0.0
      %v1709 = vsel %vm515, %v1705, 0.0
      %v1710 = vsel %vm1195, %v1619, %v1615
      %v1711 = vsel %vm1183, %v1623, %v1710
      %v1712 = vsel %vm1185, %v1627, %v1711
      %v1713 = vsel %vm1187, %v1631, %v1712
      %v1714 = vsel %vm1189, %v1635, %v1713
      %v1715 = vsel %vm1191, %v1639, %v1714
      %v1716 = vsel %vm1193, %v1689, %v1715
      %v1717 = vsel %vm1195, %v1647, %v1643
      %v1718 = vsel %vm1183, %v1651, %v1717
      %v1719 = vsel %vm1185, %v1655, %v1718
      %v1720 = vsel %vm1187, %v1659, %v1719
      %v1721 = vsel %vm1189, %v1663, %v1720
      %v1722 = vsel %vm1191, %v1667, %v1721
      %v1723 = vsel %vm1193, %v1693, %v1722
      %1724 = vrot.lane.b32.xlu0 %v1716, 16
      %v1725 = vpop.permute.xlu0 %1724
      %1726 = vrot.lane.b32.xlu0 %v1723, 16
      %v1727 = vpop.permute.xlu0 %1726
      %1732 = vrot.lane.b32.xlu0 %v1708, 32
      %v1733 = vpop.permute.xlu0 %1732
      %1734 = vrot.lane.b32.xlu0 %v1709, 32
      %v1735 = vpop.permute.xlu0 %1734
      %vm1738 = vcmask 130048
      %v1739 = vsel %vm1738, %v1682, %v1725
      %v1740 = vsel %vm1738, %v1683, %v1727
      %v1741 = vsel %vm1316, %v1739, %v1733
      %v1742 = vsel %vm1316, %v1740, %v1735
      %v1743 = vld [vmem:[%s5] sm:$0xff]
      %v1744 = vld [vmem:[%s5 + $0x8] sm:$0xff]
      %v1745 = vld [vmem:[%s5 + $0x10] sm:$0xff]
      %v1746 = vld [vmem:[%s5 + $0x18] sm:$0xff]
      %v1747 = vld [vmem:[%s5 + $0x20] sm:$0xff]
      %v1748 = vld [vmem:[%s5 + $0x28] sm:$0xff]
      %v1749 = vld [vmem:[%s6] sm:$0x1]
      %v1751 = vlaneseq
      %v1752 = vshrl.u32 %v1751, 7
      %v1753 = vsub.s32 0, %v1752
      %v1754 = vrot.slane %v1749, %v1753
      %vm1756 = vcmask 392192
      %v1758 = vsel %vm1756, %v1741, 0
      %v1761 = vsel %vm1756, %v1742, 0
      %1763 = vmatprep.subr.mxu0 0.0
      %1764 = vmatpush1.msra.mxu0 0.0
      %1765 = vmatprep.subr.mxu0 0.0
      %1766 = vmatpush1.msra.mxu0 0.0
      %1767 = vmatprep.subr.mxu0 0.0
      %1768 = vmatpush1.msra.mxu0 0.0
      %1769 = vmatprep.subr.mxu0 0.0
      %1770 = vmatpush1.msra.mxu0 0.0
      %1771 = vmatprep.subr.mxu0 0.0
      %1772 = vmatpush1.msra.mxu0 0.0
      %1773 = vmatprep.subr.mxu0 0.0
      %1774 = vmatpush1.msra.mxu0 0.0
      %1775 = vmatprep.subr.mxu0 0.0
      %1776 = vmatpush1.msra.mxu0 0.0
      %1777 = vmatprep.subr.mxu0 0.0
      %1778 = vmatpush1.msra.mxu0 0.0
      %1779 = vmatprep.subr.mxu0 0.0
      %1780 = vmatpush1.msra.mxu0 0.0
      %1781 = vmatprep.subr.mxu0 0.0
      %1782 = vmatpush1.msra.mxu0 0.0
      %1783 = vmatprep.subr.mxu0 0.0
      %1784 = vmatpush1.msra.mxu0 %v1748
      %1785 = vmatprep.subr.mxu0 0.0
      %1786 = vmatpush1.msra.mxu0 %v1747
      %1787 = vmatprep.subr.mxu0 0.0
      %1788 = vmatpush1.msra.mxu0 %v1746
      %1789 = vmatprep.subr.mxu0 0.0
      %1790 = vmatpush1.msra.mxu0 %v1745
      %1791 = vmatprep.subr.mxu0 0.0
      %1792 = vmatpush1.msra.mxu0 %v1744
      %1793 = vmatprep.subr.mxu0 0.0
      %1794 = vmatpush1.msra.mxu0 %v1743
      %1795 = vmatprep.subr.mxu0 0.0
      %1796 = vmatpush2.msra.mxu0 0.0
      %1797 = vmatprep.subr.mxu0 0.0
      %1798 = vmatpush2.msra.mxu0 0.0
      %1799 = vmatprep.subr.mxu0 0.0
      %1800 = vmatpush2.msra.mxu0 0.0
      %1801 = vmatprep.subr.mxu0 0.0
      %1802 = vmatpush2.msra.mxu0 0.0
      %1803 = vmatprep.subr.mxu0 0.0
      %1804 = vmatpush2.msra.mxu0 0.0
      %1805 = vmatprep.subr.mxu0 0.0
      %1806 = vmatpush2.msra.mxu0 0.0
      %1807 = vmatprep.subr.mxu0 0.0
      %1808 = vmatpush2.msra.mxu0 0.0
      %1809 = vmatprep.subr.mxu0 0.0
      %1810 = vmatpush2.msra.mxu0 0.0
      %1811 = vmatprep.subr.mxu0 0.0
      %1812 = vmatpush2.msra.mxu0 0.0
      %1813 = vmatprep.subr.mxu0 0.0
      %1814 = vmatpush2.msra.mxu0 0.0
      %1815 = vmatprep.subr.mxu0 0.0
      %1816 = vmatpush2.msra.mxu0 0.0
      %1817 = vmatprep.subr.mxu0 0.0
      %1818 = vmatpush2.msra.mxu0 0.0
      %1819 = vmatprep.subr.mxu0 0.0
      %1820 = vmatpush2.msra.mxu0 0.0
      %1821 = vmatprep.subr.mxu0 0.0
      %1822 = vmatpush2.msra.mxu0 0.0
      %1823 = vmatprep.subr.mxu0 0.0
      %1824 = vmatpush2.msra.mxu0 0.0
      %1825 = vmatprep.subr.mxu0 0.0
      %1826 = vmatpush2.msra.mxu0 0.0
      %1827 = vmatprep.mubr.f32.mxu0 0.0
      %1828 = vmatmul.mubr.f32.gmra.mxu0 %v1758
      %v1829 = vpop.f32.mrf.mxu0
      %v1830 = vadd.f32 %v1754, %v1829
      %v1831 = vpop.f32.mrf.mxu0
      %1832 = vmatprep.mubr.f32.mxu0 0.0
      %1833 = vmatmul.mubr.f32.gmra.mxu0 %v1761
      %v1834 = vpop.f32.mrf.mxu0
      %v1835 = vadd.f32 %v1754, %v1834
      %v1836 = vpop.f32.mrf.mxu0
      %1837 = vdwg.mxu0
      %v1838 = vmax.f32 %v1830, 0.0
      %v1839 = vmax.f32 %v1835, 0.0
      %v1842 = vcombine.high %v1838, %v1838
      %v1844 = vunpack.c.l.s4 1983009808
      %v1845 = vunpack.c.0.s8 %v1844
      %v1846 = vlaneseq
      %v1847 = vshrl.u32 %v1846, 7
      %v1848 = vsub.s32 %v1845, %v1847
      %v1849 = vrot.slane %v1838, %v1848
      %v1851 = vunpack.c.l.s4 1983009808
      %v1852 = vunpack.c.0.s8 %v1851
      %v1853 = vlaneseq
      %v1854 = vshrl.u32 %v1853, 7
      %v1855 = vsub.s32 %v1852, %v1854
      %v1856 = vrot.slane %v1842, %v1855
      %v1857 = vcombine.high %v1849, %v1849
      %v1858 = vcombine.high %v1856, %v1856
      %v1859 = vcombine.high %v1839, %v1839
      %v1861 = vunpack.c.l.s4 1983009808
      %v1862 = vunpack.c.0.s8 %v1861
      %v1863 = vlaneseq
      %v1864 = vshrl.u32 %v1863, 7
      %v1865 = vsub.s32 %v1862, %v1864
      %v1866 = vrot.slane %v1839, %v1865
      %v1868 = vunpack.c.l.s4 1983009808
      %v1869 = vunpack.c.0.s8 %v1868
      %v1870 = vlaneseq
      %v1871 = vshrl.u32 %v1870, 7
      %v1872 = vsub.s32 %v1869, %v1871
      %v1873 = vrot.slane %v1859, %v1872
      %v1874 = vcombine.high %v1866, %v1866
      %v1875 = vcombine.high %v1873, %v1873
      %v1884 = vrot.slane %v1849, 7
      %v1885 = vrot.slane %v1884, 2
      %v1886 = vrot.slane %v1857, 7
      %v1887 = vrot.slane %v1886, 2
      %v1888 = vrot.slane %v1856, 7
      %v1889 = vrot.slane %v1888, 2
      %v1890 = vrot.slane %v1858, 7
      %v1891 = vrot.slane %v1890, 2
      %v1892 = vrot.slane %v1866, 7
      %v1893 = vrot.slane %v1892, 2
      %v1894 = vrot.slane %v1874, 7
      %v1895 = vrot.slane %v1894, 2
      %v1896 = vrot.slane %v1873, 7
      %v1897 = vrot.slane %v1896, 2
      %v1898 = vrot.slane %v1875, 7
      %v1899 = vrot.slane %v1898, 2
      %v1908 = vmax.f32 %v1849, %v1885
      %v1909 = vmax.f32 %v1857, %v1887
      %v1910 = vmax.f32 %v1856, %v1889
      %v1911 = vmax.f32 %v1858, %v1891
      %v1912 = vmax.f32 %v1866, %v1893
      %v1913 = vmax.f32 %v1874, %v1895
      %v1914 = vmax.f32 %v1873, %v1897
      %v1915 = vmax.f32 %v1875, %v1899
      %v1922 = vlaneseq
      %v1923 = vshrl.u32 %v1922, 7
      %v1924 = vsub.s32 0, %v1923
      %v1925 = vrot.slane %v1908, %v1924
      %v1926 = vlaneseq
      %v1927 = vshrl.u32 %v1926, 7
      %v1928 = vsub.s32 0, %v1927
      %v1929 = vrot.slane %v1909, %v1928
      %v1930 = vlaneseq
      %v1931 = vshrl.u32 %v1930, 7
      %v1932 = vsub.s32 0, %v1931
      %v1933 = vrot.slane %v1910, %v1932
      %v1934 = vlaneseq
      %v1935 = vshrl.u32 %v1934, 7
      %v1936 = vsub.s32 0, %v1935
      %v1937 = vrot.slane %v1912, %v1936
      %v1938 = vlaneseq
      %v1939 = vshrl.u32 %v1938, 7
      %v1940 = vsub.s32 0, %v1939
      %v1941 = vrot.slane %v1913, %v1940
      %v1942 = vlaneseq
      %v1943 = vshrl.u32 %v1942, 7
      %v1944 = vsub.s32 0, %v1943
      %v1945 = vrot.slane %v1914, %v1944
      %v1946 = vsel %vm1183, %v1929, %v1925
      %v1947 = vsel %vm1185, %v1933, %v1946
      %v1948 = vsel %vm1183, %v1941, %v1937
      %v1949 = vsel %vm1185, %v1945, %v1948
      %v1952 = vsel %vm490, 0.0, %v1947
      %v1953 = vsel %vm490, 0.0, %v1949
      %v1956 = vlaneseq
      %v1957 = vshrl.u32 %v1956, 7
      %v1958 = vsub.s32 0, %v1957
      %v1959 = vrot.slane %v1911, %v1958
      %v1960 = vlaneseq
      %v1961 = vshrl.u32 %v1960, 7
      %v1962 = vsub.s32 0, %v1961
      %v1963 = vrot.slane %v1915, %v1962
      %v1964 = vsel %vm1195, %v1933, %v1929
      %v1965 = vsel %vm1183, %v1959, %v1964
      %v1966 = vsel %vm1195, %v1945, %v1941
      %v1967 = vsel %vm1183, %v1963, %v1966
      %vm1970 = vcmask 1042432
      %v1971 = vsel %vm1970, %v1965, 0.0
      %v1972 = vsel %vm1970, %v1967, 0.0
      %v1973 = vsel %vm1195, %v1929, %v1925
      %v1974 = vsel %vm1183, %v1933, %v1973
      %v1975 = vsel %vm1185, %v1959, %v1974
      %v1976 = vsel %vm1195, %v1941, %v1937
      %v1977 = vsel %vm1183, %v1945, %v1976
      %v1978 = vsel %vm1185, %v1963, %v1977
      %1979 = vrot.lane.b32.xlu0 %v1975, 8
      %v1980 = vpop.permute.xlu0 %1979
      %1981 = vrot.lane.b32.xlu0 %v1978, 8
      %v1982 = vpop.permute.xlu0 %1981
      %1987 = vrot.lane.b32.xlu0 %v1971, 16
      %v1988 = vpop.permute.xlu0 %1987
      %1989 = vrot.lane.b32.xlu0 %v1972, 16
      %v1990 = vpop.permute.xlu0 %1989
      %vm1993 = vcmask 64512
      %v1994 = vsel %vm1993, %v1952, %v1980
      %v1995 = vsel %vm1993, %v1953, %v1982
      %v1996 = vsel %vm1738, %v1994, %v1988
      %v1997 = vsel %vm1738, %v1995, %v1990
      %v1998 = vld [vmem:[%s7] sm:$0xff]
      %v1999 = vld [vmem:[%s7 + $0x8] sm:$0xff]
      %v2000 = vld [vmem:[%s7 + $0x10] sm:$0xff]
      %v2001 = vld [vmem:[%s8] sm:$0x1]
      %v2003 = vlaneseq
      %v2004 = vshrl.u32 %v2003, 7
      %v2005 = vsub.s32 0, %v2004
      %v2006 = vrot.slane %v2001, %v2005
      %v2009 = vcombine.low %v1996, %v1997
      %v2010 = vcombine.low %v2006, %v2006
      %vm2012 = vcmask 195584
      %v2013 = vsel %vm2012, %v2009, 0
      %2015 = vmatprep.subr.mxu0 0.0
      %2016 = vmatpush1.msra.mxu0 0.0
      %2017 = vmatprep.subr.mxu0 0.0
      %2018 = vmatpush1.msra.mxu0 0.0
      %2019 = vmatprep.subr.mxu0 0.0
      %2020 = vmatpush1.msra.mxu0 0.0
      %2021 = vmatprep.subr.mxu0 0.0
      %2022 = vmatpush1.msra.mxu0 0.0
      %2023 = vmatprep.subr.mxu0 0.0
      %2024 = vmatpush1.msra.mxu0 0.0
      %2025 = vmatprep.subr.mxu0 0.0
      %2026 = vmatpush1.msra.mxu0 0.0
      %2027 = vmatprep.subr.mxu0 0.0
      %2028 = vmatpush1.msra.mxu0 0.0
      %2029 = vmatprep.subr.mxu0 0.0
      %2030 = vmatpush1.msra.mxu0 0.0
      %2031 = vmatprep.subr.mxu0 0.0
      %2032 = vmatpush1.msra.mxu0 0.0
      %2033 = vmatprep.subr.mxu0 0.0
      %2034 = vmatpush1.msra.mxu0 0.0
      %2035 = vmatprep.subr.mxu0 0.0
      %2036 = vmatpush1.msra.mxu0 0.0
      %2037 = vmatprep.subr.mxu0 0.0
      %2038 = vmatpush1.msra.mxu0 0.0
      %2039 = vmatprep.subr.mxu0 0.0
      %2040 = vmatpush1.msra.mxu0 0.0
      %2041 = vmatprep.subr.mxu0 0.0
      %2042 = vmatpush1.msra.mxu0 %v2000
      %2043 = vmatprep.subr.mxu0 0.0
      %2044 = vmatpush1.msra.mxu0 %v1999
      %2045 = vmatprep.subr.mxu0 0.0
      %2046 = vmatpush1.msra.mxu0 %v1998
      %2047 = vmatprep.subr.mxu0 0.0
      %2048 = vmatpush2.msra.mxu0 0.0
      %2049 = vmatprep.subr.mxu0 0.0
      %2050 = vmatpush2.msra.mxu0 0.0
      %2051 = vmatprep.subr.mxu0 0.0
      %2052 = vmatpush2.msra.mxu0 0.0
      %2053 = vmatprep.subr.mxu0 0.0
      %2054 = vmatpush2.msra.mxu0 0.0
      %2055 = vmatprep.subr.mxu0 0.0
      %2056 = vmatpush2.msra.mxu0 0.0
      %2057 = vmatprep.subr.mxu0 0.0
      %2058 = vmatpush2.msra.mxu0 0.0
      %2059 = vmatprep.subr.mxu0 0.0
      %2060 = vmatpush2.msra.mxu0 0.0
      %2061 = vmatprep.subr.mxu0 0.0
      %2062 = vmatpush2.msra.mxu0 0.0
      %2063 = vmatprep.subr.mxu0 0.0
      %2064 = vmatpush2.msra.mxu0 0.0
      %2065 = vmatprep.subr.mxu0 0.0
      %2066 = vmatpush2.msra.mxu0 0.0
      %2067 = vmatprep.subr.mxu0 0.0
      %2068 = vmatpush2.msra.mxu0 0.0
      %2069 = vmatprep.subr.mxu0 0.0
      %2070 = vmatpush2.msra.mxu0 0.0
      %2071 = vmatprep.subr.mxu0 0.0
      %2072 = vmatpush2.msra.mxu0 0.0
      %2073 = vmatprep.subr.mxu0 0.0
      %2074 = vmatpush2.msra.mxu0 0.0
      %2075 = vmatprep.subr.mxu0 0.0
      %2076 = vmatpush2.msra.mxu0 0.0
      %2077 = vmatprep.subr.mxu0 0.0
      %2078 = vmatpush2.msra.mxu0 0.0
      %2079 = vmatprep.mubr.f32.mxu0 0.0
      %2080 = vmatmul.mubr.f32.gmra.mxu0 %v2013
      %v2081 = vpop.f32.mrf.mxu0
      %v2082 = vadd.f32 %v2010, %v2081
      %v2083 = vpop.f32.mrf.mxu0
      %2084 = vdwg.mxu0
      %v2086 = vcombine.high %v2082, %v2082
      %v2088 = vmax.f32 %v2082, 0.0
      %v2089 = vmax.f32 %v2086, 0.0
      %v2092 = vrot.slane %v2088, 7
      %v2093 = vrot.slane %v2089, 7
      %v2096 = vsel %vm490, 0.0, %v2092
      %v2097 = vsel %vm490, 0.0, %v2093
      %2098 = vrot.lane.b32.xlu0 %v2088, 16
      %v2099 = vpop.permute.xlu0 %2098
      %2100 = vrot.lane.b32.xlu0 %v2089, 16
      %v2101 = vpop.permute.xlu0 %2100
      %v2104 = vsel %vm1738, %v2096, %v2099
      %v2105 = vsel %vm1738, %v2097, %v2101
      %v2106 = vrot.slane %v2088, 1
      %v2107 = vrot.slane %v2089, 1
      %v2110 = vsel %vm1970, %v2106, 0.0
      %v2111 = vsel %vm1970, %v2107, 0.0
      %2114 = vrot.lane.b32.xlu0 %v2110, 16
      %v2115 = vpop.permute.xlu0 %2114
      %2116 = vrot.lane.b32.xlu0 %v2111, 16
      %v2117 = vpop.permute.xlu0 %2116
      %v2120 = vsel %vm1738, %v2088, %v2115
      %v2121 = vsel %vm1738, %v2089, %v2117
      %v2122 = vld [vmem:[%s9] sm:$0xff]
      %v2123 = vld [vmem:[%s9 + $0x8] sm:$0xff]
      %v2124 = vld [vmem:[%s9 + $0x10] sm:$0xff]
      %v2125 = vld [vmem:[%s9 + $0x18] sm:$0xff]
      %v2126 = vld [vmem:[%s11] sm:$0x1]
      %v2128 = vlaneseq
      %v2129 = vshrl.u32 %v2128, 7
      %v2130 = vsub.s32 0, %v2129
      %v2131 = vrot.slane %v2126, %v2130
      %v2134 = vcombine.low %v2104, %v2105
      %v2135 = vcombine.low %v2131, %v2131
      %v2137 = vsel %vm1316, %v2134, 0
      %2139 = vmatprep.subr.mxu0 0.0
      %2140 = vmatpush1.msra.mxu0 0.0
      %2141 = vmatprep.subr.mxu0 0.0
      %2142 = vmatpush1.msra.mxu0 0.0
      %2143 = vmatprep.subr.mxu0 0.0
      %2144 = vmatpush1.msra.mxu0 0.0
      %2145 = vmatprep.subr.mxu0 0.0
      %2146 = vmatpush1.msra.mxu0 0.0
      %2147 = vmatprep.subr.mxu0 0.0
      %2148 = vmatpush1.msra.mxu0 0.0
      %2149 = vmatprep.subr.mxu0 0.0
      %2150 = vmatpush1.msra.mxu0 0.0
      %2151 = vmatprep.subr.mxu0 0.0
      %2152 = vmatpush1.msra.mxu0 0.0
      %2153 = vmatprep.subr.mxu0 0.0
      %2154 = vmatpush1.msra.mxu0 0.0
      %2155 = vmatprep.subr.mxu0 0.0
      %2156 = vmatpush1.msra.mxu0 0.0
      %2157 = vmatprep.subr.mxu0 0.0
      %2158 = vmatpush1.msra.mxu0 0.0
      %2159 = vmatprep.subr.mxu0 0.0
      %2160 = vmatpush1.msra.mxu0 0.0
      %2161 = vmatprep.subr.mxu0 0.0
      %2162 = vmatpush1.msra.mxu0 0.0
      %2163 = vmatprep.subr.mxu0 0.0
      %2164 = vmatpush1.msra.mxu0 %v2125
      %2165 = vmatprep.subr.mxu0 0.0
      %2166 = vmatpush1.msra.mxu0 %v2124
      %2167 = vmatprep.subr.mxu0 0.0
      %2168 = vmatpush1.msra.mxu0 %v2123
      %2169 = vmatprep.subr.mxu0 0.0
      %2170 = vmatpush1.msra.mxu0 %v2122
      %2171 = vmatprep.subr.mxu0 0.0
      %2172 = vmatpush2.msra.mxu0 0.0
      %2173 = vmatprep.subr.mxu0 0.0
      %2174 = vmatpush2.msra.mxu0 0.0
      %2175 = vmatprep.subr.mxu0 0.0
      %2176 = vmatpush2.msra.mxu0 0.0
      %2177 = vmatprep.subr.mxu0 0.0
      %2178 = vmatpush2.msra.mxu0 0.0
      %2179 = vmatprep.subr.mxu0 0.0
      %2180 = vmatpush2.msra.mxu0 0.0
      %2181 = vmatprep.subr.mxu0 0.0
      %2182 = vmatpush2.msra.mxu0 0.0
      %2183 = vmatprep.subr.mxu0 0.0
      %2184 = vmatpush2.msra.mxu0 0.0
      %2185 = vmatprep.subr.mxu0 0.0
      %2186 = vmatpush2.msra.mxu0 0.0
      %2187 = vmatprep.subr.mxu0 0.0
      %2188 = vmatpush2.msra.mxu0 0.0
      %2189 = vmatprep.subr.mxu0 0.0
      %2190 = vmatpush2.msra.mxu0 0.0
      %2191 = vmatprep.subr.mxu0 0.0
      %2192 = vmatpush2.msra.mxu0 0.0
      %2193 = vmatprep.subr.mxu0 0.0
      %2194 = vmatpush2.msra.mxu0 0.0
      %2195 = vmatprep.subr.mxu0 0.0
      %2196 = vmatpush2.msra.mxu0 0.0
      %2197 = vmatprep.subr.mxu0 0.0
      %2198 = vmatpush2.msra.mxu0 0.0
      %2199 = vmatprep.subr.mxu0 0.0
      %2200 = vmatpush2.msra.mxu0 0.0
      %2201 = vmatprep.subr.mxu0 0.0
      %2202 = vmatpush2.msra.mxu0 0.0
      %2203 = vmatprep.mubr.f32.mxu0 0.0
      %2204 = vmatmul.mubr.f32.gmra.mxu0 %v2137
      %v2205 = vpop.f32.mrf.mxu0
      %v2206 = vadd.f32 %v2135, %v2205
      %v2207 = vpop.f32.mrf.mxu0
      %2208 = vdwg.mxu0
      %v2210 = vcombine.high %v2206, %v2206
      %v2212 = vld [vmem:[%s10] sm:$0xff]
      %v2213 = vld [vmem:[%s10 + $0x8] sm:$0xff]
      %v2214 = vld [vmem:[%s10 + $0x10] sm:$0xff]
      %v2215 = vld [vmem:[%s10 + $0x18] sm:$0xff]
      %v2218 = vcombine.low %v2120, %v2121
      %v2219 = vsel %vm1316, %v2218, 0
      %2221 = vmatprep.subr.mxu0 0.0
      %2222 = vmatpush1.msra.mxu0 0.0
      %2223 = vmatprep.subr.mxu0 0.0
      %2224 = vmatpush1.msra.mxu0 0.0
      %2225 = vmatprep.subr.mxu0 0.0
      %2226 = vmatpush1.msra.mxu0 0.0
      %2227 = vmatprep.subr.mxu0 0.0
      %2228 = vmatpush1.msra.mxu0 0.0
      %2229 = vmatprep.subr.mxu0 0.0
      %2230 = vmatpush1.msra.mxu0 0.0
      %2231 = vmatprep.subr.mxu0 0.0
      %2232 = vmatpush1.msra.mxu0 0.0
      %2233 = vmatprep.subr.mxu0 0.0
      %2234 = vmatpush1.msra.mxu0 0.0
      %2235 = vmatprep.subr.mxu0 0.0
      %2236 = vmatpush1.msra.mxu0 0.0
      %2237 = vmatprep.subr.mxu0 0.0
      %2238 = vmatpush1.msra.mxu0 0.0
      %2239 = vmatprep.subr.mxu0 0.0
      %2240 = vmatpush1.msra.mxu0 0.0
      %2241 = vmatprep.subr.mxu0 0.0
      %2242 = vmatpush1.msra.mxu0 0.0
      %2243 = vmatprep.subr.mxu0 0.0
      %2244 = vmatpush1.msra.mxu0 0.0
      %2245 = vmatprep.subr.mxu0 0.0
      %2246 = vmatpush1.msra.mxu0 %v2215
      %2247 = vmatprep.subr.mxu0 0.0
      %2248 = vmatpush1.msra.mxu0 %v2214
      %2249 = vmatprep.subr.mxu0 0.0
      %2250 = vmatpush1.msra.mxu0 %v2213
      %2251 = vmatprep.subr.mxu0 0.0
      %2252 = vmatpush1.msra.mxu0 %v2212
      %2253 = vmatprep.subr.mxu0 0.0
      %2254 = vmatpush2.msra.mxu0 0.0
      %2255 = vmatprep.subr.mxu0 0.0
      %2256 = vmatpush2.msra.mxu0 0.0
      %2257 = vmatprep.subr.mxu0 0.0
      %2258 = vmatpush2.msra.mxu0 0.0
      %2259 = vmatprep.subr.mxu0 0.0
      %2260 = vmatpush2.msra.mxu0 0.0
      %2261 = vmatprep.subr.mxu0 0.0
      %2262 = vmatpush2.msra.mxu0 0.0
      %2263 = vmatprep.subr.mxu0 0.0
      %2264 = vmatpush2.msra.mxu0 0.0
      %2265 = vmatprep.subr.mxu0 0.0
      %2266 = vmatpush2.msra.mxu0 0.0
      %2267 = vmatprep.subr.mxu0 0.0
      %2268 = vmatpush2.msra.mxu0 0.0
      %2269 = vmatprep.subr.mxu0 0.0
      %2270 = vmatpush2.msra.mxu0 0.0
      %2271 = vmatprep.subr.mxu0 0.0
      %2272 = vmatpush2.msra.mxu0 0.0
      %2273 = vmatprep.subr.mxu0 0.0
      %2274 = vmatpush2.msra.mxu0 0.0
      %2275 = vmatprep.subr.mxu0 0.0
      %2276 = vmatpush2.msra.mxu0 0.0
      %2277 = vmatprep.subr.mxu0 0.0
      %2278 = vmatpush2.msra.mxu0 0.0
      %2279 = vmatprep.subr.mxu0 0.0
      %2280 = vmatpush2.msra.mxu0 0.0
      %2281 = vmatprep.subr.mxu0 0.0
      %2282 = vmatpush2.msra.mxu0 0.0
      %2283 = vmatprep.subr.mxu0 0.0
      %2284 = vmatpush2.msra.mxu0 0.0
      %2285 = vmatprep.mubr.f32.mxu0 0.0
      %2286 = vmatmul.mubr.f32.gmra.mxu0 %v2219
      %v2287 = vpop.f32.mrf.mxu0
      %v2288 = vadd.f32 %v2135, %v2287
      %v2289 = vpop.f32.mrf.mxu0
      %2290 = vdwg.mxu0
      %v2292 = vcombine.high %v2288, %v2288
      %v2294 = vmax.f32 %v2206, 0.0
      %v2295 = vmax.f32 %v2210, 0.0
      %v2296 = vmax.f32 %v2288, 0.0
      %v2297 = vmax.f32 %v2292, 0.0
      %v2301 = vunpack.c.l.s4 1966171168
      %v2302 = vunpack.c.0.s8 %v2301
      %v2303 = vlaneseq
      %v2304 = vshrl.u32 %v2303, 7
      %v2305 = vsub.s32 %v2302, %v2304
      %v2306 = vrot.slane %v2294, %v2305
      %v2307 = vcombine.high %v2306, %v2306
      %v2309 = vunpack.c.l.s4 1966171168
      %v2310 = vunpack.c.0.s8 %v2309
      %v2311 = vlaneseq
      %v2312 = vshrl.u32 %v2311, 7
      %v2313 = vsub.s32 %v2310, %v2312
      %v2314 = vrot.slane %v2306, %v2313
      %v2316 = vunpack.c.l.s4 1966171168
      %v2317 = vunpack.c.0.s8 %v2316
      %v2318 = vlaneseq
      %v2319 = vshrl.u32 %v2318, 7
      %v2320 = vsub.s32 %v2317, %v2319
      %v2321 = vrot.slane %v2307, %v2320
      %v2322 = vcombine.high %v2314, %v2314
      %v2323 = vcombine.high %v2321, %v2321
      %v2325 = vunpack.c.l.s4 1966171168
      %v2326 = vunpack.c.0.s8 %v2325
      %v2327 = vlaneseq
      %v2328 = vshrl.u32 %v2327, 7
      %v2329 = vsub.s32 %v2326, %v2328
      %v2330 = vrot.slane %v2295, %v2329
      %v2331 = vcombine.high %v2330, %v2330
      %v2333 = vunpack.c.l.s4 1966171168
      %v2334 = vunpack.c.0.s8 %v2333
      %v2335 = vlaneseq
      %v2336 = vshrl.u32 %v2335, 7
      %v2337 = vsub.s32 %v2334, %v2336
      %v2338 = vrot.slane %v2330, %v2337
      %v2340 = vunpack.c.l.s4 1966171168
      %v2341 = vunpack.c.0.s8 %v2340
      %v2342 = vlaneseq
      %v2343 = vshrl.u32 %v2342, 7
      %v2344 = vsub.s32 %v2341, %v2343
      %v2345 = vrot.slane %v2331, %v2344
      %v2346 = vcombine.high %v2338, %v2338
      %v2347 = vcombine.high %v2345, %v2345
      %v2359 = vunpack.c.l.s4 1966171168
      %v2360 = vunpack.c.0.s8 %v2359
      %v2361 = vlaneseq
      %v2362 = vshrl.u32 %v2361, 7
      %v2363 = vsub.s32 %v2360, %v2362
      %v2364 = vrot.slane %v2296, %v2363
      %v2365 = vcombine.high %v2364, %v2364
      %v2367 = vunpack.c.l.s4 1966171168
      %v2368 = vunpack.c.0.s8 %v2367
      %v2369 = vlaneseq
      %v2370 = vshrl.u32 %v2369, 7
      %v2371 = vsub.s32 %v2368, %v2370
      %v2372 = vrot.slane %v2364, %v2371
      %v2374 = vunpack.c.l.s4 1966171168
      %v2375 = vunpack.c.0.s8 %v2374
      %v2376 = vlaneseq
      %v2377 = vshrl.u32 %v2376, 7
      %v2378 = vsub.s32 %v2375, %v2377
      %v2379 = vrot.slane %v2365, %v2378
      %v2380 = vcombine.high %v2372, %v2372
      %v2381 = vcombine.high %v2379, %v2379
      %v2383 = vunpack.c.l.s4 1966171168
      %v2384 = vunpack.c.0.s8 %v2383
      %v2385 = vlaneseq
      %v2386 = vshrl.u32 %v2385, 7
      %v2387 = vsub.s32 %v2384, %v2386
      %v2388 = vrot.slane %v2297, %v2387
      %v2389 = vcombine.high %v2388, %v2388
      %v2391 = vunpack.c.l.s4 1966171168
      %v2392 = vunpack.c.0.s8 %v2391
      %v2393 = vlaneseq
      %v2394 = vshrl.u32 %v2393, 7
      %v2395 = vsub.s32 %v2392, %v2394
      %v2396 = vrot.slane %v2388, %v2395
      %v2398 = vunpack.c.l.s4 1966171168
      %v2399 = vunpack.c.0.s8 %v2398
      %v2400 = vlaneseq
      %v2401 = vshrl.u32 %v2400, 7
      %v2402 = vsub.s32 %v2399, %v2401
      %v2403 = vrot.slane %v2389, %v2402
      %v2404 = vcombine.high %v2396, %v2396
      %v2405 = vcombine.high %v2403, %v2403
      %v2406 = vlaneseq
      %v2407 = vshrl.u32 %v2406, 7
      %v2408 = vsub.s32 0, %v2407
      %v2409 = vrot.slane %v2372, %v2408
      %v2410 = vlaneseq
      %v2411 = vshrl.u32 %v2410, 7
      %v2412 = vsub.s32 0, %v2411
      %v2413 = vrot.slane %v2379, %v2412
      %v2414 = vlaneseq
      %v2415 = vshrl.u32 %v2414, 7
      %v2416 = vsub.s32 0, %v2415
      %v2417 = vrot.slane %v2380, %v2416
      %v2418 = vlaneseq
      %v2419 = vshrl.u32 %v2418, 7
      %v2420 = vsub.s32 0, %v2419
      %v2421 = vrot.slane %v2381, %v2420
      %v2422 = vlaneseq
      %v2423 = vshrl.u32 %v2422, 7
      %v2424 = vsub.s32 0, %v2423
      %v2425 = vrot.slane %v2396, %v2424
      %v2426 = vlaneseq
      %v2427 = vshrl.u32 %v2426, 7
      %v2428 = vsub.s32 0, %v2427
      %v2429 = vrot.slane %v2403, %v2428
      %v2430 = vlaneseq
      %v2431 = vshrl.u32 %v2430, 7
      %v2432 = vsub.s32 0, %v2431
      %v2433 = vrot.slane %v2404, %v2432
      %v2434 = vlaneseq
      %v2435 = vshrl.u32 %v2434, 7
      %v2436 = vsub.s32 0, %v2435
      %v2437 = vrot.slane %v2405, %v2436
      %v2446 = vsel %vm490, %v2314, %v2409
      %v2447 = vsel %vm490, %v2321, %v2413
      %v2448 = vsel %vm490, %v2322, %v2417
      %v2449 = vsel %vm490, %v2323, %v2421
      %v2450 = vsel %vm490, %v2338, %v2425
      %v2451 = vsel %vm490, %v2345, %v2429
      %v2452 = vsel %vm490, %v2346, %v2433
      %v2453 = vsel %vm490, %v2347, %v2437
      %v2462 = vcombine.low %v2446, %v2447
      %v2463 = vcombine.low %v2448, %v2449
      %v2465 = vunpack.c.l.s4 1983009808
      %v2466 = vunpack.c.0.s8 %v2465
      %v2467 = vlaneseq
      %v2468 = vshrl.u32 %v2467, 7
      %v2469 = vsub.s32 %v2466, %v2468
      %v2470 = vrot.slane %v2462, %v2469
      %v2472 = vunpack.c.l.s4 1983009808
      %v2473 = vunpack.c.0.s8 %v2472
      %v2474 = vlaneseq
      %v2475 = vshrl.u32 %v2474, 7
      %v2476 = vsub.s32 %v2473, %v2475
      %v2477 = vrot.slane %v2463, %v2476
      %v2478 = vcombine.low %v2470, %v2477
      %v2479 = vcombine.low %v2450, %v2451
      %v2480 = vcombine.low %v2452, %v2453
      %v2482 = vunpack.c.l.s4 1983009808
      %v2483 = vunpack.c.0.s8 %v2482
      %v2484 = vlaneseq
      %v2485 = vshrl.u32 %v2484, 7
      %v2486 = vsub.s32 %v2483, %v2485
      %v2487 = vrot.slane %v2479, %v2486
      %v2489 = vunpack.c.l.s4 1983009808
      %v2490 = vunpack.c.0.s8 %v2489
      %v2491 = vlaneseq
      %v2492 = vshrl.u32 %v2491, 7
      %v2493 = vsub.s32 %v2490, %v2492
      %v2494 = vrot.slane %v2480, %v2493
      %v2495 = vcombine.low %v2487, %v2494
      %v2496 = vrot.slane %v2478, 7
      %v2497 = vrot.slane %v2495, 7
      %v2500 = vsel %vm490, 0.0, %v2496
      %v2501 = vsel %vm490, 0.0, %v2497
      %v2502 = vrot.slane %v2478, 1
      %v2503 = vrot.slane %v2495, 1
      %v2506 = vsel %vm515, %v2502, 0.0
      %v2507 = vsel %vm515, %v2503, 0.0
      %2508 = vrot.lane.b32.xlu0 %v2478, 32
      %v2509 = vpop.permute.xlu0 %2508
      %2510 = vrot.lane.b32.xlu0 %v2495, 32
      %v2511 = vpop.permute.xlu0 %2510
      %2516 = vrot.lane.b32.xlu0 %v2506, 64
      %v2517 = vpop.permute.xlu0 %2516
      %2518 = vrot.lane.b32.xlu0 %v2507, 64
      %v2519 = vpop.permute.xlu0 %2518
      %v2522 = vsel %vm1316, %v2500, %v2509
      %v2523 = vsel %vm1316, %v2501, %v2511
      %v2524 = vsel %vm558, %v2522, %v2517
      %v2525 = vsel %vm558, %v2523, %v2519
      %v2526 = vld [vmem:[%s12] sm:$0xff]
      %v2527 = vld [vmem:[%s12 + $0x8] sm:$0xff]
      %v2528 = vld [vmem:[%s12 + $0x10] sm:$0xff]
      %v2529 = vld [vmem:[%s12 + $0x18] sm:$0xff]
      %v2530 = vld [vmem:[%s12 + $0x20] sm:$0xff]
      %v2531 = vld [vmem:[%s12 + $0x28] sm:$0xff]
      %v2532 = vld [vmem:[%s12 + $0x30] sm:$0xff]
      %v2533 = vld [vmem:[%s12 + $0x38] sm:$0xff]
      %v2534 = vld [vmem:[%s12 + $0x40] sm:$0xff]
      %v2535 = vld [vmem:[%s12 + $0x48] sm:$0xff]
      %v2536 = vld [vmem:[%s12 + $0x50] sm:$0xff]
      %v2537 = vld [vmem:[%s12 + $0x58] sm:$0xff]
      %v2538 = vld [vmem:[%s13] sm:$0x1]
      %v2540 = vlaneseq
      %v2541 = vshrl.u32 %v2540, 7
      %v2542 = vsub.s32 0, %v2541
      %v2543 = vrot.slane %v2538, %v2542
      %v2546 = vsel %vm1344, %v2524, 0
      %v2549 = vsel %vm1344, %v2525, 0
      %2551 = vmatprep.subr.mxu0 0.0
      %2552 = vmatpush1.msra.mxu0 0.0
      %2553 = vmatprep.subr.mxu0 0.0
      %2554 = vmatpush1.msra.mxu0 0.0
      %2555 = vmatprep.subr.mxu0 0.0
      %2556 = vmatpush1.msra.mxu0 0.0
      %2557 = vmatprep.subr.mxu0 0.0
      %2558 = vmatpush1.msra.mxu0 0.0
      %2559 = vmatprep.subr.mxu0 0.0
      %2560 = vmatpush1.msra.mxu0 %v2537
      %2561 = vmatprep.subr.mxu0 0.0
      %2562 = vmatpush1.msra.mxu0 %v2536
      %2563 = vmatprep.subr.mxu0 0.0
      %2564 = vmatpush1.msra.mxu0 %v2535
      %2565 = vmatprep.subr.mxu0 0.0
      %2566 = vmatpush1.msra.mxu0 %v2534
      %2567 = vmatprep.subr.mxu0 0.0
      %2568 = vmatpush1.msra.mxu0 %v2533
      %2569 = vmatprep.subr.mxu0 0.0
      %2570 = vmatpush1.msra.mxu0 %v2532
      %2571 = vmatprep.subr.mxu0 0.0
      %2572 = vmatpush1.msra.mxu0 %v2531
      %2573 = vmatprep.subr.mxu0 0.0
      %2574 = vmatpush1.msra.mxu0 %v2530
      %2575 = vmatprep.subr.mxu0 0.0
      %2576 = vmatpush1.msra.mxu0 %v2529
      %2577 = vmatprep.subr.mxu0 0.0
      %2578 = vmatpush1.msra.mxu0 %v2528
      %2579 = vmatprep.subr.mxu0 0.0
      %2580 = vmatpush1.msra.mxu0 %v2527
      %2581 = vmatprep.subr.mxu0 0.0
      %2582 = vmatpush1.msra.mxu0 %v2526
      %2583 = vmatprep.subr.mxu0 0.0
      %2584 = vmatpush2.msra.mxu0 0.0
      %2585 = vmatprep.subr.mxu0 0.0
      %2586 = vmatpush2.msra.mxu0 0.0
      %2587 = vmatprep.subr.mxu0 0.0
      %2588 = vmatpush2.msra.mxu0 0.0
      %2589 = vmatprep.subr.mxu0 0.0
      %2590 = vmatpush2.msra.mxu0 0.0
      %2591 = vmatprep.subr.mxu0 0.0
      %2592 = vmatpush2.msra.mxu0 0.0
      %2593 = vmatprep.subr.mxu0 0.0
      %2594 = vmatpush2.msra.mxu0 0.0
      %2595 = vmatprep.subr.mxu0 0.0
      %2596 = vmatpush2.msra.mxu0 0.0
      %2597 = vmatprep.subr.mxu0 0.0
      %2598 = vmatpush2.msra.mxu0 0.0
      %2599 = vmatprep.subr.mxu0 0.0
      %2600 = vmatpush2.msra.mxu0 0.0
      %2601 = vmatprep.subr.mxu0 0.0
      %2602 = vmatpush2.msra.mxu0 0.0
      %2603 = vmatprep.subr.mxu0 0.0
      %2604 = vmatpush2.msra.mxu0 0.0
      %2605 = vmatprep.subr.mxu0 0.0
      %2606 = vmatpush2.msra.mxu0 0.0
      %2607 = vmatprep.subr.mxu0 0.0
      %2608 = vmatpush2.msra.mxu0 0.0
      %2609 = vmatprep.subr.mxu0 0.0
      %2610 = vmatpush2.msra.mxu0 0.0
      %2611 = vmatprep.subr.mxu0 0.0
      %2612 = vmatpush2.msra.mxu0 0.0
      %2613 = vmatprep.subr.mxu0 0.0
      %2614 = vmatpush2.msra.mxu0 0.0
      %2615 = vmatprep.mubr.f32.mxu0 0.0
      %2616 = vmatmul.mubr.f32.gmra.mxu0 %v2546
      %v2617 = vpop.f32.mrf.mxu0
      %v2618 = vadd.f32 %v2543, %v2617
      %v2619 = vpop.f32.mrf.mxu0
      %2620 = vmatprep.mubr.f32.mxu0 0.0
      %2621 = vmatmul.mubr.f32.gmra.mxu0 %v2549
      %v2622 = vpop.f32.mrf.mxu0
      %v2623 = vadd.f32 %v2543, %v2622
      %v2624 = vpop.f32.mrf.mxu0
      %2625 = vdwg.mxu0
      %v2626 = vxor.u32 %v2618, 2147483648
      %v2627 = vxor.u32 %v2623, 2147483648
      %v2628 = vmul.f32 %v2626, 1.442695
      %v2629 = vpow.pop %v2628
      %v2630 = vmul.f32 %v2627, 1.442695
      %v2631 = vpow.pop %v2630
      %v2632 = vadd.f32 %v2629, 1.0
      %v2633 = vadd.f32 %v2631, 1.0
      %v2634 = vrcp.pop %v2632
      %v2635 = vmul.f32 1.0, %v2634
      %v2636 = vrcp.pop %v2633
      %v2637 = vmul.f32 1.0, %v2636
      %2638 = vst [vmem:[%s472] sm:$0xff] %v2635
      %2639 = vst [vmem:[%s472 + $0x8] sm:$0xff] %v2637
      %s2640 = smul.u32 2, %s25
      %p2641 = scmp.lt.s32.totalorder %s2640, 3
      %s2642 = scalar_select %p2641, %s2640, 3
      %s2643 = smul.addr %s2642, 8
      %s2644 = scalar_lea.vmem %s14, %s2643
      // Predicated region
      $region77: #{autoencoder_forward.1} parent=75 // pred_check
        %p2645 = pneg %p342
      $region78: #{autoencoder_forward.1} parent=75 // pred_check_branch
        %2647 = sbr.rel (%p2645) target = $region80
      $region79: #{autoencoder_forward.1} parent=75 // pred_region
        %s2648 = smul.u32 2, %s25
      $region80: #{autoencoder_forward.1} parent=75 // pred_fallthru
        _
    $region76: #{autoencoder_forward.1} parent=5 // pred_fallthru
      _
    %p2649 = scmp.le.s32.totalorder 2, %s20
    // Predicated region
    $region81: #{autoencoder_forward.1} parent=5 // pred_check
      %p2650 = pneg %p2649
    $region82: #{autoencoder_forward.1} parent=5 // pred_check_branch
      %2652 = sbr.rel (%p2650) target = $region84
    $region83: #{autoencoder_forward.1} parent=5 // pred_region
      %s2653 = ssub.s32 %s20, 2
      // Predicated region
      $region85: #{autoencoder_forward.1} parent=83 // pred_check
        %p2654 = pneg %p348
      $region86: #{autoencoder_forward.1} parent=83 // pred_check_branch
        %2656 = sbr.rel (%p2654) target = $region88
      $region87: #{autoencoder_forward.1} parent=83 // pred_region
        %s2657 = smul.u32 2, %s26
        %p2658 = scmp.lt.s32.totalorder %s2657, 3
        %s2659 = scalar_select %p2658, %s2657, 3
        %s2660 = smul.addr %s2659, 8
        %s2661 = scalar_lea.vmem %s14, %s2660
      $region88: #{autoencoder_forward.1} parent=83 // pred_fallthru
        _
    $region84: #{autoencoder_forward.1} parent=5 // pred_fallthru
      _
  $region6: #{autoencoder_forward.1} parent=0 // loop_footer
    %s24 = sadd.s32 1, %s20
  $region7: #{autoencoder_forward.1} parent=0 // loop_footer_branch
    %19 = sbr.rel target = $region3
  $region8: #{autoencoder_forward.1} parent=0 // loop_exit
    _

</llo_original>
